<compile_context>
chip_gen: v6e
topology: v6e:2x2x1
jax: 0.10.0
libtpu: 0.0.40
codegen_flags: <defaults>
</compile_context>

<pallas_src>
import numpy as np
import jax
import jax.numpy as jnp
from jax.experimental import pallas as pl
from jax.experimental.pallas import tpu as pltpu

# ----- module hyper-parameters (deterministic, from __init__ defaults) -------
INPUT_DIMS = 3
NUM_FREQS = 10
MAX_FREQ_LOG2 = 10
# log_sampling=True: 2 ** linspace(0, max_freq, num_freqs)
FREQ_BANDS = tuple(
    float(f) for f in (2.0 ** np.linspace(0.0, MAX_FREQ_LOG2, NUM_FREQS))
)
OUT_DIM = INPUT_DIMS + NUM_FREQS * 2 * INPUT_DIMS  # 63


def embedder_kernel(x_ref, o_ref):
    # x_ref: (INPUT_DIMS, tile_n) VMEM tile  (feature-major: lanes = points)
    # o_ref: (OUT_DIM,   tile_n) VMEM tile
    out_dtype = o_ref.dtype

    # Raw-input passthrough (output rows 0..2).
    o_ref[0:INPUT_DIMS, :] = x_ref[...]

    # One frequency band per (statically unrolled) iteration, written straight
    # into the matching output rows -- no concatenate, no large temporary.
    # x is re-read from VMEM each iteration (vector loads are cheap) to keep
    # vreg pressure low at large tile_n; trig is computed in float32.
    for k, f in enumerate(FREQ_BANDS):
        xf = x_ref[...].astype(jnp.float32) * f
        base = INPUT_DIMS + 2 * INPUT_DIMS * k
        o_ref[base:base + INPUT_DIMS, :] = jnp.sin(xf).astype(out_dtype)
        o_ref[base + INPUT_DIMS:base + 2 * INPUT_DIMS, :] = (
            jnp.cos(xf).astype(out_dtype))


def embed(x, tile_n=4096):
    """x: (..., INPUT_DIMS) float array -> (..., OUT_DIM)."""
    orig_shape = x.shape
    assert orig_shape[-1] == INPUT_DIMS
    n = int(np.prod(orig_shape[:-1], dtype=np.int64))

    # Feature-major slab: (3, n); the point axis maps to lanes in the kernel.
    xt = x.reshape(n, INPUT_DIMS).T

    # Lane tile: multiple of 128, shrunk for small inputs, large by default so
    # each grid step moves ~1 MB of output.
    tile_n = int(max(128, min(tile_n, pl.cdiv(n, 128) * 128)))
    grid = (pl.cdiv(n, tile_n),)

    out = pl.pallas_call(
        embedder_kernel,
        out_shape=jax.ShapeDtypeStruct((OUT_DIM, n), x.dtype),
        grid_spec=pltpu.PrefetchScalarGridSpec(
            num_scalar_prefetch=0,
            grid=grid,
            in_specs=[pl.BlockSpec((INPUT_DIMS, tile_n), lambda i: (0, i))],
            out_specs=pl.BlockSpec((OUT_DIM, tile_n), lambda i: (0, i)),
        ),
        compiler_params=pltpu.CompilerParams(
            dimension_semantics=("parallel",)),
    )(xt)

    return out.T.reshape(*orig_shape[:-1], OUT_DIM)


def embed_ref(x):
    """Pure-JAX reference matching the PyTorch forward (f32 trig like kernel)."""
    parts = [x]
    for f in FREQ_BANDS:
        xf = x.astype(jnp.float32) * f
        parts.append(jnp.sin(xf).astype(x.dtype))
        parts.append(jnp.cos(xf).astype(x.dtype))
    return jnp.concatenate(parts, axis=-1)


if __name__ == "__main__":
    key = jax.random.PRNGKey(0)
    k1, k2 = jax.random.split(key)

    # Case 1: small point cloud (batch=2, 64 points, 3 coords); n = 128
    # divides the lane tile exactly.
    x1 = jax.random.normal(k1, (2, 64, INPUT_DIMS), dtype=jnp.float32)
    out1 = jax.block_until_ready(embed(x1))
    assert out1.shape == (2, 64, OUT_DIM), out1.shape
    np.testing.assert_allclose(np.asarray(out1), np.asarray(embed_ref(x1)),
                               rtol=1e-5, atol=1e-5)

    # Case 2: ragged point count (3*50 = 150) with a small forced tile so the
    # grid has >1 step and the last block exercises the OOB read/drop path.
    x2 = jax.random.normal(k2, (3, 50, INPUT_DIMS), dtype=jnp.float32)
    out2 = jax.block_until_ready(embed(x2, tile_n=128))
    assert out2.shape == (3, 50, OUT_DIM), out2.shape
    np.testing.assert_allclose(np.asarray(out2), np.asarray(embed_ref(x2)),
                               rtol=1e-5, atol=1e-5)

    print("KERNEL_OK")
</pallas_src>

<mosaic_0001>
module attributes {stable_mosaic.version = 11 : i64} {
  func.func @embedder_kernel(%arg0: i32, %arg1: memref<3x128xf32, #tpu.memory_space<vmem>>, %arg2: memref<63x128xf32, #tpu.memory_space<vmem>>) attributes {dimension_semantics = [#tpu.dimension_semantics<parallel>], iteration_bounds = array<i64: 1>, scalar_prefetch = 0 : i64, scratch_operands = 0 : i64, tpu.core_type = #tpu.core_type<tc>, window_params = [{transform_indices = @transform_0, window_bounds = array<i64: 3, 128>}, {transform_indices = @transform_1, window_bounds = array<i64: 63, 128>}]} {
    %c0 = arith.constant 0 : index
    %c0_0 = arith.constant 0 : index
    %0 = vector.load %arg1[%c0, %c0_0] : memref<3x128xf32, #tpu.memory_space<vmem>>, vector<3x128xf32>
    %c0_1 = arith.constant 0 : index
    %c0_2 = arith.constant 0 : index
    %1 = vector.load %arg2[%c0_1, %c0_2] : memref<63x128xf32, #tpu.memory_space<vmem>>, vector<3x128xf32>
    tpu.vector_store %arg2[%c0_1, %c0_2], %0 {strides = array<i32>} : memref<63x128xf32, #tpu.memory_space<vmem>>, vector<3x128xf32>,
    %c0_3 = arith.constant 0 : index
    %c0_4 = arith.constant 0 : index
    %2 = vector.load %arg1[%c0_3, %c0_4] : memref<3x128xf32, #tpu.memory_space<vmem>>, vector<3x128xf32>
    %cst = arith.constant 1.000000e+00 : f32
    %3 = vector.broadcast %cst : f32 to vector<3x128xf32>
    %4 = arith.mulf %2, %3 : vector<3x128xf32>
    %5 = math.sin %4 : vector<3x128xf32>
    %c3 = arith.constant 3 : index
    %c0_5 = arith.constant 0 : index
    %6 = vector.load %arg2[%c3, %c0_5] : memref<63x128xf32, #tpu.memory_space<vmem>>, vector<3x128xf32>
    tpu.vector_store %arg2[%c3, %c0_5], %5 {strides = array<i32>} : memref<63x128xf32, #tpu.memory_space<vmem>>, vector<3x128xf32>,
    %7 = math.cos %4 : vector<3x128xf32>
    %c6 = arith.constant 6 : index
    %c0_6 = arith.constant 0 : index
    %8 = vector.load %arg2[%c6, %c0_6] : memref<63x128xf32, #tpu.memory_space<vmem>>, vector<3x128xf32>
    tpu.vector_store %arg2[%c6, %c0_6], %7 {strides = array<i32>} : memref<63x128xf32, #tpu.memory_space<vmem>>, vector<3x128xf32>,
    %c0_7 = arith.constant 0 : index
    %c0_8 = arith.constant 0 : index
    %9 = vector.load %arg1[%c0_7, %c0_8] : memref<3x128xf32, #tpu.memory_space<vmem>>, vector<3x128xf32>
    %cst_9 = arith.constant 2.16011953 : f32
    %10 = vector.broadcast %cst_9 : f32 to vector<3x128xf32>
    %11 = arith.mulf %9, %10 : vector<3x128xf32>
    %12 = math.sin %11 : vector<3x128xf32>
    %c9 = arith.constant 9 : index
    %c0_10 = arith.constant 0 : index
    %13 = vector.load %arg2[%c9, %c0_10] : memref<63x128xf32, #tpu.memory_space<vmem>>, vector<3x128xf32>
    tpu.vector_store %arg2[%c9, %c0_10], %12 {strides = array<i32>} : memref<63x128xf32, #tpu.memory_space<vmem>>, vector<3x128xf32>,
    %14 = math.cos %11 : vector<3x128xf32>
    %c12 = arith.constant 12 : index
    %c0_11 = arith.constant 0 : index
    %15 = vector.load %arg2[%c12, %c0_11] : memref<63x128xf32, #tpu.memory_space<vmem>>, vector<3x128xf32>
    tpu.vector_store %arg2[%c12, %c0_11], %14 {strides = array<i32>} : memref<63x128xf32, #tpu.memory_space<vmem>>, vector<3x128xf32>,
    %c0_12 = arith.constant 0 : index
    %c0_13 = arith.constant 0 : index
    %16 = vector.load %arg1[%c0_12, %c0_13] : memref<3x128xf32, #tpu.memory_space<vmem>>, vector<3x128xf32>
    %cst_14 = arith.constant 4.66611624 : f32
    %17 = vector.broadcast %cst_14 : f32 to vector<3x128xf32>
    %18 = arith.mulf %16, %17 : vector<3x128xf32>
    %19 = math.sin %18 : vector<3x128xf32>
    %c15 = arith.constant 15 : index
    %c0_15 = arith.constant 0 : index
    %20 = vector.load %arg2[%c15, %c0_15] : memref<63x128xf32, #tpu.memory_space<vmem>>, vector<3x128xf32>
    tpu.vector_store %arg2[%c15, %c0_15], %19 {strides = array<i32>} : memref<63x128xf32, #tpu.memory_space<vmem>>, vector<3x128xf32>,
    %21 = math.cos %18 : vector<3x128xf32>
    %c18 = arith.constant 18 : index
    %c0_16 = arith.constant 0 : index
    %22 = vector.load %arg2[%c18, %c0_16] : memref<63x128xf32, #tpu.memory_space<vmem>>, vector<3x128xf32>
    tpu.vector_store %arg2[%c18, %c0_16], %21 {strides = array<i32>} : memref<63x128xf32, #tpu.memory_space<vmem>>, vector<3x128xf32>,
    %c0_17 = arith.constant 0 : index
    %c0_18 = arith.constant 0 : index
    %23 = vector.load %arg1[%c0_17, %c0_18] : memref<3x128xf32, #tpu.memory_space<vmem>>, vector<3x128xf32>
    %cst_19 = arith.constant 10.0793686 : f32
    %24 = vector.broadcast %cst_19 : f32 to vector<3x128xf32>
    %25 = arith.mulf %23, %24 : vector<3x128xf32>
    %26 = math.sin %25 : vector<3x128xf32>
    %c21 = arith.constant 21 : index
    %c0_20 = arith.constant 0 : index
    %27 = vector.load %arg2[%c21, %c0_20] : memref<63x128xf32, #tpu.memory_space<vmem>>, vector<3x128xf32>
    tpu.vector_store %arg2[%c21, %c0_20], %26 {strides = array<i32>} : memref<63x128xf32, #tpu.memory_space<vmem>>, vector<3x128xf32>,
    %28 = math.cos %25 : vector<3x128xf32>
    %c24 = arith.constant 24 : index
    %c0_21 = arith.constant 0 : index
    %29 = vector.load %arg2[%c24, %c0_21] : memref<63x128xf32, #tpu.memory_space<vmem>>, vector<3x128xf32>
    tpu.vector_store %arg2[%c24, %c0_21], %28 {strides = array<i32>} : memref<63x128xf32, #tpu.memory_space<vmem>>, vector<3x128xf32>,
    %c0_22 = arith.constant 0 : index
    %c0_23 = arith.constant 0 : index
    %30 = vector.load %arg1[%c0_22, %c0_23] : memref<3x128xf32, #tpu.memory_space<vmem>>, vector<3x128xf32>
    %cst_24 = arith.constant 21.7726402 : f32
    %31 = vector.broadcast %cst_24 : f32 to vector<3x128xf32>
    %32 = arith.mulf %30, %31 : vector<3x128xf32>
    %33 = math.sin %32 : vector<3x128xf32>
    %c27 = arith.constant 27 : index
    %c0_25 = arith.constant 0 : index
    %34 = vector.load %arg2[%c27, %c0_25] : memref<63x128xf32, #tpu.memory_space<vmem>>, vector<3x128xf32>
    tpu.vector_store %arg2[%c27, %c0_25], %33 {strides = array<i32>} : memref<63x128xf32, #tpu.memory_space<vmem>>, vector<3x128xf32>,
    %35 = math.cos %32 : vector<3x128xf32>
    %c30 = arith.constant 30 : index
    %c0_26 = arith.constant 0 : index
    %36 = vector.load %arg2[%c30, %c0_26] : memref<63x128xf32, #tpu.memory_space<vmem>>, vector<3x128xf32>
    tpu.vector_store %arg2[%c30, %c0_26], %35 {strides = array<i32>} : memref<63x128xf32, #tpu.memory_space<vmem>>, vector<3x128xf32>,
    %c0_27 = arith.constant 0 : index
    %c0_28 = arith.constant 0 : index
    %37 = vector.load %arg1[%c0_27, %c0_28] : memref<3x128xf32, #tpu.memory_space<vmem>>, vector<3x128xf32>
    %cst_29 = arith.constant 47.0315056 : f32
    %38 = vector.broadcast %cst_29 : f32 to vector<3x128xf32>
    %39 = arith.mulf %37, %38 : vector<3x128xf32>
    %40 = math.sin %39 : vector<3x128xf32>
    %c33 = arith.constant 33 : index
    %c0_30 = arith.constant 0 : index
    %41 = vector.load %arg2[%c33, %c0_30] : memref<63x128xf32, #tpu.memory_space<vmem>>, vector<3x128xf32>
    tpu.vector_store %arg2[%c33, %c0_30], %40 {strides = array<i32>} : memref<63x128xf32, #tpu.memory_space<vmem>>, vector<3x128xf32>,
    %42 = math.cos %39 : vector<3x128xf32>
    %c36 = arith.constant 36 : index
    %c0_31 = arith.constant 0 : index
    %43 = vector.load %arg2[%c36, %c0_31] : memref<63x128xf32, #tpu.memory_space<vmem>>, vector<3x128xf32>
    tpu.vector_store %arg2[%c36, %c0_31], %42 {strides = array<i32>} : memref<63x128xf32, #tpu.memory_space<vmem>>, vector<3x128xf32>,
    %c0_32 = arith.constant 0 : index
    %c0_33 = arith.constant 0 : index
    %44 = vector.load %arg1[%c0_32, %c0_33] : memref<3x128xf32, #tpu.memory_space<vmem>>, vector<3x128xf32>
    %cst_34 = arith.constant 101.593666 : f32
    %45 = vector.broadcast %cst_34 : f32 to vector<3x128xf32>
    %46 = arith.mulf %44, %45 : vector<3x128xf32>
    %47 = math.sin %46 : vector<3x128xf32>
    %c39 = arith.constant 39 : index
    %c0_35 = arith.constant 0 : index
    %48 = vector.load %arg2[%c39, %c0_35] : memref<63x128xf32, #tpu.memory_space<vmem>>, vector<3x128xf32>
    tpu.vector_store %arg2[%c39, %c0_35], %47 {strides = array<i32>} : memref<63x128xf32, #tpu.memory_space<vmem>>, vector<3x128xf32>,
    %49 = math.cos %46 : vector<3x128xf32>
    %c42 = arith.constant 42 : index
    %c0_36 = arith.constant 0 : index
    %50 = vector.load %arg2[%c42, %c0_36] : memref<63x128xf32, #tpu.memory_space<vmem>>, vector<3x128xf32>
    tpu.vector_store %arg2[%c42, %c0_36], %49 {strides = array<i32>} : memref<63x128xf32, #tpu.memory_space<vmem>>, vector<3x128xf32>,
    %c0_37 = arith.constant 0 : index
    %c0_38 = arith.constant 0 : index
    %51 = vector.load %arg1[%c0_37, %c0_38] : memref<3x128xf32, #tpu.memory_space<vmem>>, vector<3x128xf32>
    %cst_39 = arith.constant 219.454453 : f32
    %52 = vector.broadcast %cst_39 : f32 to vector<3x128xf32>
    %53 = arith.mulf %51, %52 : vector<3x128xf32>
    %54 = math.sin %53 : vector<3x128xf32>
    %c45 = arith.constant 45 : index
    %c0_40 = arith.constant 0 : index
    %55 = vector.load %arg2[%c45, %c0_40] : memref<63x128xf32, #tpu.memory_space<vmem>>, vector<3x128xf32>
    tpu.vector_store %arg2[%c45, %c0_40], %54 {strides = array<i32>} : memref<63x128xf32, #tpu.memory_space<vmem>>, vector<3x128xf32>,
    %56 = math.cos %53 : vector<3x128xf32>
    %c48 = arith.constant 48 : index
    %c0_41 = arith.constant 0 : index
    %57 = vector.load %arg2[%c48, %c0_41] : memref<63x128xf32, #tpu.memory_space<vmem>>, vector<3x128xf32>
    tpu.vector_store %arg2[%c48, %c0_41], %56 {strides = array<i32>} : memref<63x128xf32, #tpu.memory_space<vmem>>, vector<3x128xf32>,
    %c0_42 = arith.constant 0 : index
    %c0_43 = arith.constant 0 : index
    %58 = vector.load %arg1[%c0_42, %c0_43] : memref<3x128xf32, #tpu.memory_space<vmem>>, vector<3x128xf32>
    %cst_44 = arith.constant 474.047852 : f32
    %59 = vector.broadcast %cst_44 : f32 to vector<3x128xf32>
    %60 = arith.mulf %58, %59 : vector<3x128xf32>
    %61 = math.sin %60 : vector<3x128xf32>
    %c51 = arith.constant 51 : index
    %c0_45 = arith.constant 0 : index
    %62 = vector.load %arg2[%c51, %c0_45] : memref<63x128xf32, #tpu.memory_space<vmem>>, vector<3x128xf32>
    tpu.vector_store %arg2[%c51, %c0_45], %61 {strides = array<i32>} : memref<63x128xf32, #tpu.memory_space<vmem>>, vector<3x128xf32>,
    %63 = math.cos %60 : vector<3x128xf32>
    %c54 = arith.constant 54 : index
    %c0_46 = arith.constant 0 : index
    %64 = vector.load %arg2[%c54, %c0_46] : memref<63x128xf32, #tpu.memory_space<vmem>>, vector<3x128xf32>
    tpu.vector_store %arg2[%c54, %c0_46], %63 {strides = array<i32>} : memref<63x128xf32, #tpu.memory_space<vmem>>, vector<3x128xf32>,
    %c0_47 = arith.constant 0 : index
    %c0_48 = arith.constant 0 : index
    %65 = vector.load %arg1[%c0_47, %c0_48] : memref<3x128xf32, #tpu.memory_space<vmem>>, vector<3x128xf32>
    %cst_49 = arith.constant 1.024000e+03 : f32
    %66 = vector.broadcast %cst_49 : f32 to vector<3x128xf32>
    %67 = arith.mulf %65, %66 : vector<3x128xf32>
    %68 = math.sin %67 : vector<3x128xf32>
    %c57 = arith.constant 57 : index
    %c0_50 = arith.constant 0 : index
    %69 = vector.load %arg2[%c57, %c0_50] : memref<63x128xf32, #tpu.memory_space<vmem>>, vector<3x128xf32>
    tpu.vector_store %arg2[%c57, %c0_50], %68 {strides = array<i32>} : memref<63x128xf32, #tpu.memory_space<vmem>>, vector<3x128xf32>,
    %70 = math.cos %67 : vector<3x128xf32>
    %c60 = arith.constant 60 : index
    %c0_51 = arith.constant 0 : index
    %71 = vector.load %arg2[%c60, %c0_51] : memref<63x128xf32, #tpu.memory_space<vmem>>, vector<3x128xf32>
    tpu.vector_store %arg2[%c60, %c0_51], %70 {strides = array<i32>} : memref<63x128xf32, #tpu.memory_space<vmem>>, vector<3x128xf32>,
    return
  }
  func.func @transform_0(%arg0: i32) -> (i32, i32) {
    %c0_i32 = arith.constant 0 : i32
    %c0_i32_0 = arith.constant 0 : i32
    return %c0_i32, %arg0 : i32, i32
  }
  func.func @transform_1(%arg0: i32) -> (i32, i32) {
    %c0_i32 = arith.constant 0 : i32
    %c0_i32_0 = arith.constant 0 : i32
    return %c0_i32, %arg0 : i32, i32
  }
}

</mosaic_0001>

<llo_original>
// kernel: tpu_custom_call.1
$region0: #{tpu_custom_call.1}
  #allocation0 [shape = 'u32[]', space=smem, size = 0x4, offset = 0x4, fixed_abs, tag = 'smem constant byte address 0x4 - core index']
  #allocation1 [shape = 'u32[144,128]{1,0:T(1,128)}', space=vmem, size = 0x12000, scoped, tag = 'internal scratch']
  %s0 = inlined_call_operand.hbm [shape: f32[3,128], index: 0, kind: input, shape index: {}]
  %s1 = inlined_call_operand.hbm [shape: f32[63,128], index: 1, kind: output, shape index: {}]
  %s2 = sld [smem:[#allocation0]]
  $region18: #{tpu_custom_call.1} parent=0
    _
  %s4 = ssub.s32 1, %s2
  %s5 = scalar_select 0, %s4, %s2
  $region1: #{tpu_custom_call.1} parent=0
    #allocation2 [shape = 'u8[2048]{0}', space=vmem, size = 0x800, scoped, tag = 'input window, operand 0, single buffered']
    #allocation3 [shape = 's32[1]{0}', space=sflag, size = 0x4, scoped, tag = 'scoped memory for tpu_custom_call.1']
    #allocation4 [shape = 's32[1]{0}', space=sflag, size = 0x4, scoped, tag = 'scoped memory for tpu_custom_call.1']
    #allocation5 [shape = 'u8[32768]{0}', space=vmem, size = 0x8000, scoped, tag = 'output window, operand 0, single buffered']
    %6 = vsyncpa [#allocation3], 0
    %7 = vsyncpa [#allocation4], 0
    // Predicated region
    $region2: #{tpu_custom_call.1} parent=1 // pred_check
      _
    $region3: #{tpu_custom_call.1} parent=1 // pred_check_branch
      %9 = sbr.rel (0) target = $region5
    $region4: #{tpu_custom_call.1} parent=1 // pred_region
      %s11 = ssub.s32 64, 64
      %12 = vsyncadd [#allocation3], %s11
      %s14 = sshll.u32 [#allocation2], 4
      %s15 = int_to_ptr.vmem [resolvable:$true] %s14
      %17 = dma.hbm_to_vmem [thread:$0]  %s0, 64, %s15, [#allocation3]
    $region5: #{tpu_custom_call.1} parent=1 // pred_fallthru
      _
    // Predicated region
    $region6: #{tpu_custom_call.1} parent=1 // pred_check
      _
    $region7: #{tpu_custom_call.1} parent=1 // pred_check_branch
      %19 = sbr.rel (0) target = $region9
    $region8: #{tpu_custom_call.1} parent=1 // pred_region
      %20 = dma.done [#allocation3], 64
    $region9: #{tpu_custom_call.1} parent=1 // pred_fallthru
      _
    %v21 = vld [vmem:[#allocation2] sm:$0x7]
    %22 = vst [vmem:[#allocation5] sm:$0x7] %v21
    %v23 = vld [vmem:[#allocation2] sm:$0x7]
    %v24 = vand.u32 2147483647, %v23
    %vm25 = vcmp.le.f32.partialorder %v24, 0.7853982
    %vm26 = vcmp.lt.s32.totalorder %v23, 0
    %v27 = vand.u32 %v23, 2139095040
    %v28 = vshrl.u32 %v27, 23
    %v29 = vsub.s32 %v28, 127
    %v30 = vand.u32 2147483647, %v23
    %v31 = vand.u32 %v30, 8388607
    %v32 = vor.u32 %v31, 8388608
    %v33 = vsub.s32 0, %v32
    %v34 = vadd.s32 %v29, 1
    %vm35 = vcmp.gt.s32.totalorder %v34, 0
    %v36 = vsel %vm35, %v34, 0
    %v37 = vshrl.u32 %v36, 5
    %v38 = vand.u32 %v36, 31
    %v39 = vsub.s32 32, %v38
    %v40 = vshrl.u32 683565275, %v39
    %v41 = vshll.u32 683565275, %v38
    %v42 = vshrl.u32 2475754826, %v39
    %v43 = vor.u32 %v41, %v42
    %v44 = vshll.u32 2475754826, %v38
    %v45 = vshrl.u32 2131351028, %v39
    %v46 = vor.u32 %v44, %v45
    %v47 = vshll.u32 2131351028, %v38
    %v48 = vshrl.u32 2102212464, %v39
    %v49 = vor.u32 %v47, %v48
    %v50 = vshll.u32 2102212464, %v38
    %v51 = vshrl.u32 920167782, %v39
    %v52 = vor.u32 %v50, %v51
    %v53 = vshll.u32 920167782, %v38
    %v54 = vshrl.u32 1326507024, %v39
    %v55 = vor.u32 %v53, %v54
    %vm56 = vcmp.lt.s32.totalorder %v37, 1
    %vm57 = vcmp.lt.s32.totalorder %v37, 2
    %vm58 = vcmp.lt.s32.totalorder %v37, 3
    %vm59 = vcmp.lt.s32.totalorder %v37, 4
    %v60 = vsel %vm56, %v40, %v43
    %v61 = vsel %vm59, %v49, 2102212464
    %v62 = vsel %vm58, %v46, %v61
    %v63 = vsel %vm57, %v60, %v62
    %v64 = vsel %vm56, %v43, %v46
    %v65 = vsel %vm59, %v52, 920167782
    %v66 = vsel %vm58, %v49, %v65
    %v67 = vsel %vm57, %v64, %v66
    %v68 = vsel %vm56, %v46, %v49
    %v69 = vsel %vm59, %v55, 1326507024
    %v70 = vsel %vm58, %v52, %v69
    %v71 = vsel %vm57, %v68, %v70
    %v72 = vshll.u32 %v32, 8
    %v73 = vmul.u32.u64.compose %v72, %v71
    %v74 = vextract.low.u32 %v73
    %v75 = vextract.high.u32 %v73
    %v76 = vmul.u32.u64.compose %v72, %v67
    %v77 = vextract.low.u32 %v76
    %v78 = vextract.high.u32 %v76
    %v79 = vmul.u32 %v72, %v63
    %v80 = vadd.s32 %v75, %v77
    %vm81 = vc.u32 %v75, %v77
    %v82 = vadd.s32 %v78, 1
    %v83 = vsel %vm81, %v82, %v78
    %v84 = vadd.s32 %v79, %v83
    %v85 = vadd.s32 %v84, 536870912
    %v86 = vshrl.u32 %v85, 30
    %v87 = vshll.u32 %v86, 30
    %v88 = vsub.s32 %v84, %v87
    %vm89 = vcmp.lt.s32.totalorder %v88, 0
    %v90 = vsub.s32 0, %v88
    %v91 = vsel %vm89, %v90, %v88
    %v92 = vclz %v91
    %v93 = vsub.s32 %v92, 2
    %vm94 = vcmp.gt.s32.totalorder 0, %v93
    %v95 = vsel %vm94, 0, %v93
    %v96 = vsub.s32 32, %v95
    %v97 = vshll.u32 %v88, %v95
    %v98 = vshrl.u32 %v80, %v96
    %v99 = vor.u32 %v97, %v98
    %v100 = vsub.s32 4294967266, %v95
    %v101 = vadd.s32 %v100, 127
    %v102 = vshll.u32 %v101, 23
    %v103 = vor.u32 4788187, %v102
    %v104 = vand.u32 2147483647, %v103
    %v106 = vcvt.s32.f32 %v99
    %v107 = vmul.f32 %v106, %v104
    %v108 = vxor.u32 %v107, 2147483648
    %v109 = vsel %vm26, %v108, %v107
    %v110 = vsub.s32 4, %v86
    %v111 = vsel %vm26, %v110, %v86
    %v112 = vsel %vm25, %v23, %v109
    %v113 = vsel %vm25, 0, %v111
    %v114 = vcosq.f32.pop %v112
    %v115 = vsinq.f32.pop %v112
    %vm116 = vweird.f32 %v23
    %v117 = vadd.s32 %v113, 3
    %v118 = vand.u32 %v117, 3
    %vm119 = vcmp.lt.s32.totalorder %v118, 2
    %vm120 = vcmp.eq.s32.totalorder %v118, 0
    %v121 = vxor.u32 %v115, 2147483648
    %v122 = vsel %vm120, %v114, %v121
    %vm123 = vcmp.eq.s32.totalorder %v118, 2
    %v124 = vxor.u32 %v114, 2147483648
    %v125 = vsel %vm123, %v124, %v115
    %v126 = vsel %vm119, %v122, %v125
    %v127 = vsel %vm116, nan, %v126
    %128 = vst [vmem:[#allocation5 + $0x3] sm:$0x7] %v127
    %v129 = vand.u32 2147483647, %v23
    %vm130 = vcmp.le.f32.partialorder %v129, 0.7853982
    %vm131 = vcmp.lt.s32.totalorder %v23, 0
    %v132 = vand.u32 %v23, 2139095040
    %v133 = vshrl.u32 %v132, 23
    %v134 = vsub.s32 %v133, 127
    %v135 = vand.u32 2147483647, %v23
    %v136 = vand.u32 %v135, 8388607
    %v137 = vor.u32 %v136, 8388608
    %v138 = vsub.s32 0, %v137
    %v139 = vadd.s32 %v134, 1
    %vm140 = vcmp.gt.s32.totalorder %v139, 0
    %v141 = vsel %vm140, %v139, 0
    %v142 = vshrl.u32 %v141, 5
    %v143 = vand.u32 %v141, 31
    %v144 = vsub.s32 32, %v143
    %v145 = vshrl.u32 683565275, %v144
    %v146 = vshll.u32 683565275, %v143
    %v147 = vshrl.u32 2475754826, %v144
    %v148 = vor.u32 %v146, %v147
    %v149 = vshll.u32 2475754826, %v143
    %v150 = vshrl.u32 2131351028, %v144
    %v151 = vor.u32 %v149, %v150
    %v152 = vshll.u32 2131351028, %v143
    %v153 = vshrl.u32 2102212464, %v144
    %v154 = vor.u32 %v152, %v153
    %v155 = vshll.u32 2102212464, %v143
    %v156 = vshrl.u32 920167782, %v144
    %v157 = vor.u32 %v155, %v156
    %v158 = vshll.u32 920167782, %v143
    %v159 = vshrl.u32 1326507024, %v144
    %v160 = vor.u32 %v158, %v159
    %vm161 = vcmp.lt.s32.totalorder %v142, 1
    %vm162 = vcmp.lt.s32.totalorder %v142, 2
    %vm163 = vcmp.lt.s32.totalorder %v142, 3
    %vm164 = vcmp.lt.s32.totalorder %v142, 4
    %v165 = vsel %vm161, %v145, %v148
    %v166 = vsel %vm164, %v154, 2102212464
    %v167 = vsel %vm163, %v151, %v166
    %v168 = vsel %vm162, %v165, %v167
    %v169 = vsel %vm161, %v148, %v151
    %v170 = vsel %vm164, %v157, 920167782
    %v171 = vsel %vm163, %v154, %v170
    %v172 = vsel %vm162, %v169, %v171
    %v173 = vsel %vm161, %v151, %v154
    %v174 = vsel %vm164, %v160, 1326507024
    %v175 = vsel %vm163, %v157, %v174
    %v176 = vsel %vm162, %v173, %v175
    %v177 = vshll.u32 %v137, 8
    %v178 = vmul.u32.u64.compose %v177, %v176
    %v179 = vextract.low.u32 %v178
    %v180 = vextract.high.u32 %v178
    %v181 = vmul.u32.u64.compose %v177, %v172
    %v182 = vextract.low.u32 %v181
    %v183 = vextract.high.u32 %v181
    %v184 = vmul.u32 %v177, %v168
    %v185 = vadd.s32 %v180, %v182
    %vm186 = vc.u32 %v180, %v182
    %v187 = vadd.s32 %v183, 1
    %v188 = vsel %vm186, %v187, %v183
    %v189 = vadd.s32 %v184, %v188
    %v190 = vadd.s32 %v189, 536870912
    %v191 = vshrl.u32 %v190, 30
    %v192 = vshll.u32 %v191, 30
    %v193 = vsub.s32 %v189, %v192
    %vm194 = vcmp.lt.s32.totalorder %v193, 0
    %v195 = vsub.s32 0, %v193
    %v196 = vsel %vm194, %v195, %v193
    %v197 = vclz %v196
    %v198 = vsub.s32 %v197, 2
    %vm199 = vcmp.gt.s32.totalorder 0, %v198
    %v200 = vsel %vm199, 0, %v198
    %v201 = vsub.s32 32, %v200
    %v202 = vshll.u32 %v193, %v200
    %v203 = vshrl.u32 %v185, %v201
    %v204 = vor.u32 %v202, %v203
    %v205 = vsub.s32 4294967266, %v200
    %v206 = vadd.s32 %v205, 127
    %v207 = vshll.u32 %v206, 23
    %v208 = vor.u32 4788187, %v207
    %v209 = vand.u32 2147483647, %v208
    %v211 = vcvt.s32.f32 %v204
    %v212 = vmul.f32 %v211, %v209
    %v213 = vxor.u32 %v212, 2147483648
    %v214 = vsel %vm131, %v213, %v212
    %v215 = vsub.s32 4, %v191
    %v216 = vsel %vm131, %v215, %v191
    %v217 = vsel %vm130, %v23, %v214
    %v218 = vsel %vm130, 0, %v216
    %v219 = vcosq.f32.pop %v217
    %v220 = vsinq.f32.pop %v217
    %vm221 = vweird.f32 %v23
    %v222 = vand.u32 %v218, 3
    %vm223 = vcmp.lt.s32.totalorder %v222, 2
    %vm224 = vcmp.eq.s32.totalorder %v222, 0
    %v225 = vxor.u32 %v220, 2147483648
    %v226 = vsel %vm224, %v219, %v225
    %vm227 = vcmp.eq.s32.totalorder %v222, 2
    %v228 = vxor.u32 %v219, 2147483648
    %v229 = vsel %vm227, %v228, %v220
    %v230 = vsel %vm223, %v226, %v229
    %v231 = vsel %vm221, nan, %v230
    %232 = vst [vmem:[#allocation5 + $0x6] sm:$0x7] %v231
    %v233 = vld [vmem:[#allocation2] sm:$0x7]
    %v234 = vmul.f32 %v233, 2.1601195
    %v235 = vand.u32 2147483647, %v234
    %vm236 = vcmp.le.f32.partialorder %v235, 0.7853982
    %vm237 = vcmp.lt.s32.totalorder %v234, 0
    %v238 = vand.u32 %v234, 2139095040
    %v239 = vshrl.u32 %v238, 23
    %v240 = vsub.s32 %v239, 127
    %v241 = vand.u32 2147483647, %v234
    %v242 = vand.u32 %v241, 8388607
    %v243 = vor.u32 %v242, 8388608
    %v244 = vsub.s32 0, %v243
    %v245 = vadd.s32 %v240, 1
    %vm246 = vcmp.gt.s32.totalorder %v245, 0
    %v247 = vsel %vm246, %v245, 0
    %v248 = vshrl.u32 %v247, 5
    %v249 = vand.u32 %v247, 31
    %v250 = vsub.s32 32, %v249
    %v251 = vshrl.u32 683565275, %v250
    %v252 = vshll.u32 683565275, %v249
    %v253 = vshrl.u32 2475754826, %v250
    %v254 = vor.u32 %v252, %v253
    %v255 = vshll.u32 2475754826, %v249
    %v256 = vshrl.u32 2131351028, %v250
    %v257 = vor.u32 %v255, %v256
    %v258 = vshll.u32 2131351028, %v249
    %v259 = vshrl.u32 2102212464, %v250
    %v260 = vor.u32 %v258, %v259
    %v261 = vshll.u32 2102212464, %v249
    %v262 = vshrl.u32 920167782, %v250
    %v263 = vor.u32 %v261, %v262
    %v264 = vshll.u32 920167782, %v249
    %v265 = vshrl.u32 1326507024, %v250
    %v266 = vor.u32 %v264, %v265
    %vm267 = vcmp.lt.s32.totalorder %v248, 1
    %vm268 = vcmp.lt.s32.totalorder %v248, 2
    %vm269 = vcmp.lt.s32.totalorder %v248, 3
    %vm270 = vcmp.lt.s32.totalorder %v248, 4
    %v271 = vsel %vm267, %v251, %v254
    %v272 = vsel %vm270, %v260, 2102212464
    %v273 = vsel %vm269, %v257, %v272
    %v274 = vsel %vm268, %v271, %v273
    %v275 = vsel %vm267, %v254, %v257
    %v276 = vsel %vm270, %v263, 920167782
    %v277 = vsel %vm269, %v260, %v276
    %v278 = vsel %vm268, %v275, %v277
    %v279 = vsel %vm267, %v257, %v260
    %v280 = vsel %vm270, %v266, 1326507024
    %v281 = vsel %vm269, %v263, %v280
    %v282 = vsel %vm268, %v279, %v281
    %v283 = vshll.u32 %v243, 8
    %v284 = vmul.u32.u64.compose %v283, %v282
    %v285 = vextract.low.u32 %v284
    %v286 = vextract.high.u32 %v284
    %v287 = vmul.u32.u64.compose %v283, %v278
    %v288 = vextract.low.u32 %v287
    %v289 = vextract.high.u32 %v287
    %v290 = vmul.u32 %v283, %v274
    %v291 = vadd.s32 %v286, %v288
    %vm292 = vc.u32 %v286, %v288
    %v293 = vadd.s32 %v289, 1
    %v294 = vsel %vm292, %v293, %v289
    %v295 = vadd.s32 %v290, %v294
    %v296 = vadd.s32 %v295, 536870912
    %v297 = vshrl.u32 %v296, 30
    %v298 = vshll.u32 %v297, 30
    %v299 = vsub.s32 %v295, %v298
    %vm300 = vcmp.lt.s32.totalorder %v299, 0
    %v301 = vsub.s32 0, %v299
    %v302 = vsel %vm300, %v301, %v299
    %v303 = vclz %v302
    %v304 = vsub.s32 %v303, 2
    %vm305 = vcmp.gt.s32.totalorder 0, %v304
    %v306 = vsel %vm305, 0, %v304
    %v307 = vsub.s32 32, %v306
    %v308 = vshll.u32 %v299, %v306
    %v309 = vshrl.u32 %v291, %v307
    %v310 = vor.u32 %v308, %v309
    %v311 = vsub.s32 4294967266, %v306
    %v312 = vadd.s32 %v311, 127
    %v313 = vshll.u32 %v312, 23
    %v314 = vor.u32 4788187, %v313
    %v315 = vand.u32 2147483647, %v314
    %v317 = vcvt.s32.f32 %v310
    %v318 = vmul.f32 %v317, %v315
    %v319 = vxor.u32 %v318, 2147483648
    %v320 = vsel %vm237, %v319, %v318
    %v321 = vsub.s32 4, %v297
    %v322 = vsel %vm237, %v321, %v297
    %v323 = vsel %vm236, %v234, %v320
    %v324 = vsel %vm236, 0, %v322
    %v325 = vcosq.f32.pop %v323
    %v326 = vsinq.f32.pop %v323
    %vm327 = vweird.f32 %v234
    %v328 = vadd.s32 %v324, 3
    %v329 = vand.u32 %v328, 3
    %vm330 = vcmp.lt.s32.totalorder %v329, 2
    %vm331 = vcmp.eq.s32.totalorder %v329, 0
    %v332 = vxor.u32 %v326, 2147483648
    %v333 = vsel %vm331, %v325, %v332
    %vm334 = vcmp.eq.s32.totalorder %v329, 2
    %v335 = vxor.u32 %v325, 2147483648
    %v336 = vsel %vm334, %v335, %v326
    %v337 = vsel %vm330, %v333, %v336
    %v338 = vsel %vm327, nan, %v337
    %339 = vst [vmem:[#allocation5 + $0x9] sm:$0x7] %v338
    %v340 = vand.u32 2147483647, %v234
    %vm341 = vcmp.le.f32.partialorder %v340, 0.7853982
    %vm342 = vcmp.lt.s32.totalorder %v234, 0
    %v343 = vand.u32 %v234, 2139095040
    %v344 = vshrl.u32 %v343, 23
    %v345 = vsub.s32 %v344, 127
    %v346 = vand.u32 2147483647, %v234
    %v347 = vand.u32 %v346, 8388607
    %v348 = vor.u32 %v347, 8388608
    %v349 = vsub.s32 0, %v348
    %v350 = vadd.s32 %v345, 1
    %vm351 = vcmp.gt.s32.totalorder %v350, 0
    %v352 = vsel %vm351, %v350, 0
    %v353 = vshrl.u32 %v352, 5
    %v354 = vand.u32 %v352, 31
    %v355 = vsub.s32 32, %v354
    %v356 = vshrl.u32 683565275, %v355
    %v357 = vshll.u32 683565275, %v354
    %v358 = vshrl.u32 2475754826, %v355
    %v359 = vor.u32 %v357, %v358
    %v360 = vshll.u32 2475754826, %v354
    %v361 = vshrl.u32 2131351028, %v355
    %v362 = vor.u32 %v360, %v361
    %v363 = vshll.u32 2131351028, %v354
    %v364 = vshrl.u32 2102212464, %v355
    %v365 = vor.u32 %v363, %v364
    %v366 = vshll.u32 2102212464, %v354
    %v367 = vshrl.u32 920167782, %v355
    %v368 = vor.u32 %v366, %v367
    %v369 = vshll.u32 920167782, %v354
    %v370 = vshrl.u32 1326507024, %v355
    %v371 = vor.u32 %v369, %v370
    %vm372 = vcmp.lt.s32.totalorder %v353, 1
    %vm373 = vcmp.lt.s32.totalorder %v353, 2
    %vm374 = vcmp.lt.s32.totalorder %v353, 3
    %vm375 = vcmp.lt.s32.totalorder %v353, 4
    %v376 = vsel %vm372, %v356, %v359
    %v377 = vsel %vm375, %v365, 2102212464
    %v378 = vsel %vm374, %v362, %v377
    %v379 = vsel %vm373, %v376, %v378
    %v380 = vsel %vm372, %v359, %v362
    %v381 = vsel %vm375, %v368, 920167782
    %v382 = vsel %vm374, %v365, %v381
    %v383 = vsel %vm373, %v380, %v382
    %v384 = vsel %vm372, %v362, %v365
    %v385 = vsel %vm375, %v371, 1326507024
    %v386 = vsel %vm374, %v368, %v385
    %v387 = vsel %vm373, %v384, %v386
    %v388 = vshll.u32 %v348, 8
    %v389 = vmul.u32.u64.compose %v388, %v387
    %v390 = vextract.low.u32 %v389
    %v391 = vextract.high.u32 %v389
    %v392 = vmul.u32.u64.compose %v388, %v383
    %v393 = vextract.low.u32 %v392
    %v394 = vextract.high.u32 %v392
    %v395 = vmul.u32 %v388, %v379
    %v396 = vadd.s32 %v391, %v393
    %vm397 = vc.u32 %v391, %v393
    %v398 = vadd.s32 %v394, 1
    %v399 = vsel %vm397, %v398, %v394
    %v400 = vadd.s32 %v395, %v399
    %v401 = vadd.s32 %v400, 536870912
    %v402 = vshrl.u32 %v401, 30
    %v403 = vshll.u32 %v402, 30
    %v404 = vsub.s32 %v400, %v403
    %vm405 = vcmp.lt.s32.totalorder %v404, 0
    %v406 = vsub.s32 0, %v404
    %v407 = vsel %vm405, %v406, %v404
    %v408 = vclz %v407
    %v409 = vsub.s32 %v408, 2
    %vm410 = vcmp.gt.s32.totalorder 0, %v409
    %v411 = vsel %vm410, 0, %v409
    %v412 = vsub.s32 32, %v411
    %v413 = vshll.u32 %v404, %v411
    %v414 = vshrl.u32 %v396, %v412
    %v415 = vor.u32 %v413, %v414
    %v416 = vsub.s32 4294967266, %v411
    %v417 = vadd.s32 %v416, 127
    %v418 = vshll.u32 %v417, 23
    %v419 = vor.u32 4788187, %v418
    %v420 = vand.u32 2147483647, %v419
    %v422 = vcvt.s32.f32 %v415
    %v423 = vmul.f32 %v422, %v420
    %v424 = vxor.u32 %v423, 2147483648
    %v425 = vsel %vm342, %v424, %v423
    %v426 = vsub.s32 4, %v402
    %v427 = vsel %vm342, %v426, %v402
    %v428 = vsel %vm341, %v234, %v425
    %v429 = vsel %vm341, 0, %v427
    %v430 = vcosq.f32.pop %v428
    %v431 = vsinq.f32.pop %v428
    %vm432 = vweird.f32 %v234
    %v433 = vand.u32 %v429, 3
    %vm434 = vcmp.lt.s32.totalorder %v433, 2
    %vm435 = vcmp.eq.s32.totalorder %v433, 0
    %v436 = vxor.u32 %v431, 2147483648
    %v437 = vsel %vm435, %v430, %v436
    %vm438 = vcmp.eq.s32.totalorder %v433, 2
    %v439 = vxor.u32 %v430, 2147483648
    %v440 = vsel %vm438, %v439, %v431
    %v441 = vsel %vm434, %v437, %v440
    %v442 = vsel %vm432, nan, %v441
    %443 = vst [vmem:[#allocation5 + $0xc] sm:$0x7] %v442
    %v444 = vld [vmem:[#allocation2] sm:$0x7]
    %v445 = vmul.f32 %v444, 4.666116
    %v446 = vand.u32 2147483647, %v445
    %vm447 = vcmp.le.f32.partialorder %v446, 0.7853982
    %vm448 = vcmp.lt.s32.totalorder %v445, 0
    %v449 = vand.u32 %v445, 2139095040
    %v450 = vshrl.u32 %v449, 23
    %v451 = vsub.s32 %v450, 127
    %v452 = vand.u32 2147483647, %v445
    %v453 = vand.u32 %v452, 8388607
    %v454 = vor.u32 %v453, 8388608
    %v455 = vsub.s32 0, %v454
    %v456 = vadd.s32 %v451, 1
    %vm457 = vcmp.gt.s32.totalorder %v456, 0
    %v458 = vsel %vm457, %v456, 0
    %v459 = vshrl.u32 %v458, 5
    %v460 = vand.u32 %v458, 31
    %v461 = vsub.s32 32, %v460
    %v462 = vshrl.u32 683565275, %v461
    %v463 = vshll.u32 683565275, %v460
    %v464 = vshrl.u32 2475754826, %v461
    %v465 = vor.u32 %v463, %v464
    %v466 = vshll.u32 2475754826, %v460
    %v467 = vshrl.u32 2131351028, %v461
    %v468 = vor.u32 %v466, %v467
    %v469 = vshll.u32 2131351028, %v460
    %v470 = vshrl.u32 2102212464, %v461
    %v471 = vor.u32 %v469, %v470
    %v472 = vshll.u32 2102212464, %v460
    %v473 = vshrl.u32 920167782, %v461
    %v474 = vor.u32 %v472, %v473
    %v475 = vshll.u32 920167782, %v460
    %v476 = vshrl.u32 1326507024, %v461
    %v477 = vor.u32 %v475, %v476
    %vm478 = vcmp.lt.s32.totalorder %v459, 1
    %vm479 = vcmp.lt.s32.totalorder %v459, 2
    %vm480 = vcmp.lt.s32.totalorder %v459, 3
    %vm481 = vcmp.lt.s32.totalorder %v459, 4
    %v482 = vsel %vm478, %v462, %v465
    %v483 = vsel %vm481, %v471, 2102212464
    %v484 = vsel %vm480, %v468, %v483
    %v485 = vsel %vm479, %v482, %v484
    %v486 = vsel %vm478, %v465, %v468
    %v487 = vsel %vm481, %v474, 920167782
    %v488 = vsel %vm480, %v471, %v487
    %v489 = vsel %vm479, %v486, %v488
    %v490 = vsel %vm478, %v468, %v471
    %v491 = vsel %vm481, %v477, 1326507024
    %v492 = vsel %vm480, %v474, %v491
    %v493 = vsel %vm479, %v490, %v492
    %v494 = vshll.u32 %v454, 8
    %v495 = vmul.u32.u64.compose %v494, %v493
    %v496 = vextract.low.u32 %v495
    %v497 = vextract.high.u32 %v495
    %v498 = vmul.u32.u64.compose %v494, %v489
    %v499 = vextract.low.u32 %v498
    %v500 = vextract.high.u32 %v498
    %v501 = vmul.u32 %v494, %v485
    %v502 = vadd.s32 %v497, %v499
    %vm503 = vc.u32 %v497, %v499
    %v504 = vadd.s32 %v500, 1
    %v505 = vsel %vm503, %v504, %v500
    %v506 = vadd.s32 %v501, %v505
    %v507 = vadd.s32 %v506, 536870912
    %v508 = vshrl.u32 %v507, 30
    %v509 = vshll.u32 %v508, 30
    %v510 = vsub.s32 %v506, %v509
    %vm511 = vcmp.lt.s32.totalorder %v510, 0
    %v512 = vsub.s32 0, %v510
    %v513 = vsel %vm511, %v512, %v510
    %v514 = vclz %v513
    %v515 = vsub.s32 %v514, 2
    %vm516 = vcmp.gt.s32.totalorder 0, %v515
    %v517 = vsel %vm516, 0, %v515
    %v518 = vsub.s32 32, %v517
    %v519 = vshll.u32 %v510, %v517
    %v520 = vshrl.u32 %v502, %v518
    %v521 = vor.u32 %v519, %v520
    %v522 = vsub.s32 4294967266, %v517
    %v523 = vadd.s32 %v522, 127
    %v524 = vshll.u32 %v523, 23
    %v525 = vor.u32 4788187, %v524
    %v526 = vand.u32 2147483647, %v525
    %v528 = vcvt.s32.f32 %v521
    %v529 = vmul.f32 %v528, %v526
    %v530 = vxor.u32 %v529, 2147483648
    %v531 = vsel %vm448, %v530, %v529
    %v532 = vsub.s32 4, %v508
    %v533 = vsel %vm448, %v532, %v508
    %v534 = vsel %vm447, %v445, %v531
    %v535 = vsel %vm447, 0, %v533
    %v536 = vcosq.f32.pop %v534
    %v537 = vsinq.f32.pop %v534
    %vm538 = vweird.f32 %v445
    %v539 = vadd.s32 %v535, 3
    %v540 = vand.u32 %v539, 3
    %vm541 = vcmp.lt.s32.totalorder %v540, 2
    %vm542 = vcmp.eq.s32.totalorder %v540, 0
    %v543 = vxor.u32 %v537, 2147483648
    %v544 = vsel %vm542, %v536, %v543
    %vm545 = vcmp.eq.s32.totalorder %v540, 2
    %v546 = vxor.u32 %v536, 2147483648
    %v547 = vsel %vm545, %v546, %v537
    %v548 = vsel %vm541, %v544, %v547
    %v549 = vsel %vm538, nan, %v548
    %550 = vst [vmem:[#allocation5 + $0xf] sm:$0x7] %v549
    %v551 = vand.u32 2147483647, %v445
    %vm552 = vcmp.le.f32.partialorder %v551, 0.7853982
    %vm553 = vcmp.lt.s32.totalorder %v445, 0
    %v554 = vand.u32 %v445, 2139095040
    %v555 = vshrl.u32 %v554, 23
    %v556 = vsub.s32 %v555, 127
    %v557 = vand.u32 2147483647, %v445
    %v558 = vand.u32 %v557, 8388607
    %v559 = vor.u32 %v558, 8388608
    %v560 = vsub.s32 0, %v559
    %v561 = vadd.s32 %v556, 1
    %vm562 = vcmp.gt.s32.totalorder %v561, 0
    %v563 = vsel %vm562, %v561, 0
    %v564 = vshrl.u32 %v563, 5
    %v565 = vand.u32 %v563, 31
    %v566 = vsub.s32 32, %v565
    %v567 = vshrl.u32 683565275, %v566
    %v568 = vshll.u32 683565275, %v565
    %v569 = vshrl.u32 2475754826, %v566
    %v570 = vor.u32 %v568, %v569
    %v571 = vshll.u32 2475754826, %v565
    %v572 = vshrl.u32 2131351028, %v566
    %v573 = vor.u32 %v571, %v572
    %v574 = vshll.u32 2131351028, %v565
    %v575 = vshrl.u32 2102212464, %v566
    %v576 = vor.u32 %v574, %v575
    %v577 = vshll.u32 2102212464, %v565
    %v578 = vshrl.u32 920167782, %v566
    %v579 = vor.u32 %v577, %v578
    %v580 = vshll.u32 920167782, %v565
    %v581 = vshrl.u32 1326507024, %v566
    %v582 = vor.u32 %v580, %v581
    %vm583 = vcmp.lt.s32.totalorder %v564, 1
    %vm584 = vcmp.lt.s32.totalorder %v564, 2
    %vm585 = vcmp.lt.s32.totalorder %v564, 3
    %vm586 = vcmp.lt.s32.totalorder %v564, 4
    %v587 = vsel %vm583, %v567, %v570
    %v588 = vsel %vm586, %v576, 2102212464
    %v589 = vsel %vm585, %v573, %v588
    %v590 = vsel %vm584, %v587, %v589
    %v591 = vsel %vm583, %v570, %v573
    %v592 = vsel %vm586, %v579, 920167782
    %v593 = vsel %vm585, %v576, %v592
    %v594 = vsel %vm584, %v591, %v593
    %v595 = vsel %vm583, %v573, %v576
    %v596 = vsel %vm586, %v582, 1326507024
    %v597 = vsel %vm585, %v579, %v596
    %v598 = vsel %vm584, %v595, %v597
    %v599 = vshll.u32 %v559, 8
    %v600 = vmul.u32.u64.compose %v599, %v598
    %v601 = vextract.low.u32 %v600
    %v602 = vextract.high.u32 %v600
    %v603 = vmul.u32.u64.compose %v599, %v594
    %v604 = vextract.low.u32 %v603
    %v605 = vextract.high.u32 %v603
    %v606 = vmul.u32 %v599, %v590
    %v607 = vadd.s32 %v602, %v604
    %vm608 = vc.u32 %v602, %v604
    %v609 = vadd.s32 %v605, 1
    %v610 = vsel %vm608, %v609, %v605
    %v611 = vadd.s32 %v606, %v610
    %v612 = vadd.s32 %v611, 536870912
    %v613 = vshrl.u32 %v612, 30
    %v614 = vshll.u32 %v613, 30
    %v615 = vsub.s32 %v611, %v614
    %vm616 = vcmp.lt.s32.totalorder %v615, 0
    %v617 = vsub.s32 0, %v615
    %v618 = vsel %vm616, %v617, %v615
    %v619 = vclz %v618
    %v620 = vsub.s32 %v619, 2
    %vm621 = vcmp.gt.s32.totalorder 0, %v620
    %v622 = vsel %vm621, 0, %v620
    %v623 = vsub.s32 32, %v622
    %v624 = vshll.u32 %v615, %v622
    %v625 = vshrl.u32 %v607, %v623
    %v626 = vor.u32 %v624, %v625
    %v627 = vsub.s32 4294967266, %v622
    %v628 = vadd.s32 %v627, 127
    %v629 = vshll.u32 %v628, 23
    %v630 = vor.u32 4788187, %v629
    %v631 = vand.u32 2147483647, %v630
    %v633 = vcvt.s32.f32 %v626
    %v634 = vmul.f32 %v633, %v631
    %v635 = vxor.u32 %v634, 2147483648
    %v636 = vsel %vm553, %v635, %v634
    %v637 = vsub.s32 4, %v613
    %v638 = vsel %vm553, %v637, %v613
    %v639 = vsel %vm552, %v445, %v636
    %v640 = vsel %vm552, 0, %v638
    %v641 = vcosq.f32.pop %v639
    %v642 = vsinq.f32.pop %v639
    %vm643 = vweird.f32 %v445
    %v644 = vand.u32 %v640, 3
    %vm645 = vcmp.lt.s32.totalorder %v644, 2
    %vm646 = vcmp.eq.s32.totalorder %v644, 0
    %v647 = vxor.u32 %v642, 2147483648
    %v648 = vsel %vm646, %v641, %v647
    %vm649 = vcmp.eq.s32.totalorder %v644, 2
    %v650 = vxor.u32 %v641, 2147483648
    %v651 = vsel %vm649, %v650, %v642
    %v652 = vsel %vm645, %v648, %v651
    %v653 = vsel %vm643, nan, %v652
    %654 = vst [vmem:[#allocation5 + $0x12] sm:$0x7] %v653
    %v655 = vld [vmem:[#allocation2] sm:$0x7]
    %v656 = vmul.f32 %v655, 10.079369
    %v657 = vand.u32 2147483647, %v656
    %vm658 = vcmp.le.f32.partialorder %v657, 0.7853982
    %vm659 = vcmp.lt.s32.totalorder %v656, 0
    %v660 = vand.u32 %v656, 2139095040
    %v661 = vshrl.u32 %v660, 23
    %v662 = vsub.s32 %v661, 127
    %v663 = vand.u32 2147483647, %v656
    %v664 = vand.u32 %v663, 8388607
    %v665 = vor.u32 %v664, 8388608
    %v666 = vsub.s32 0, %v665
    %v667 = vadd.s32 %v662, 1
    %vm668 = vcmp.gt.s32.totalorder %v667, 0
    %v669 = vsel %vm668, %v667, 0
    %v670 = vshrl.u32 %v669, 5
    %v671 = vand.u32 %v669, 31
    %v672 = vsub.s32 32, %v671
    %v673 = vshrl.u32 683565275, %v672
    %v674 = vshll.u32 683565275, %v671
    %v675 = vshrl.u32 2475754826, %v672
    %v676 = vor.u32 %v674, %v675
    %v677 = vshll.u32 2475754826, %v671
    %v678 = vshrl.u32 2131351028, %v672
    %v679 = vor.u32 %v677, %v678
    %v680 = vshll.u32 2131351028, %v671
    %v681 = vshrl.u32 2102212464, %v672
    %v682 = vor.u32 %v680, %v681
    %v683 = vshll.u32 2102212464, %v671
    %v684 = vshrl.u32 920167782, %v672
    %v685 = vor.u32 %v683, %v684
    %v686 = vshll.u32 920167782, %v671
    %v687 = vshrl.u32 1326507024, %v672
    %v688 = vor.u32 %v686, %v687
    %vm689 = vcmp.lt.s32.totalorder %v670, 1
    %vm690 = vcmp.lt.s32.totalorder %v670, 2
    %vm691 = vcmp.lt.s32.totalorder %v670, 3
    %vm692 = vcmp.lt.s32.totalorder %v670, 4
    %v693 = vsel %vm689, %v673, %v676
    %v694 = vsel %vm692, %v682, 2102212464
    %v695 = vsel %vm691, %v679, %v694
    %v696 = vsel %vm690, %v693, %v695
    %v697 = vsel %vm689, %v676, %v679
    %v698 = vsel %vm692, %v685, 920167782
    %v699 = vsel %vm691, %v682, %v698
    %v700 = vsel %vm690, %v697, %v699
    %v701 = vsel %vm689, %v679, %v682
    %v702 = vsel %vm692, %v688, 1326507024
    %v703 = vsel %vm691, %v685, %v702
    %v704 = vsel %vm690, %v701, %v703
    %v705 = vshll.u32 %v665, 8
    %v706 = vmul.u32.u64.compose %v705, %v704
    %v707 = vextract.low.u32 %v706
    %v708 = vextract.high.u32 %v706
    %v709 = vmul.u32.u64.compose %v705, %v700
    %v710 = vextract.low.u32 %v709
    %v711 = vextract.high.u32 %v709
    %v712 = vmul.u32 %v705, %v696
    %v713 = vadd.s32 %v708, %v710
    %vm714 = vc.u32 %v708, %v710
    %v715 = vadd.s32 %v711, 1
    %v716 = vsel %vm714, %v715, %v711
    %v717 = vadd.s32 %v712, %v716
    %v718 = vadd.s32 %v717, 536870912
    %v719 = vshrl.u32 %v718, 30
    %v720 = vshll.u32 %v719, 30
    %v721 = vsub.s32 %v717, %v720
    %vm722 = vcmp.lt.s32.totalorder %v721, 0
    %v723 = vsub.s32 0, %v721
    %v724 = vsel %vm722, %v723, %v721
    %v725 = vclz %v724
    %v726 = vsub.s32 %v725, 2
    %vm727 = vcmp.gt.s32.totalorder 0, %v726
    %v728 = vsel %vm727, 0, %v726
    %v729 = vsub.s32 32, %v728
    %v730 = vshll.u32 %v721, %v728
    %v731 = vshrl.u32 %v713, %v729
    %v732 = vor.u32 %v730, %v731
    %v733 = vsub.s32 4294967266, %v728
    %v734 = vadd.s32 %v733, 127
    %v735 = vshll.u32 %v734, 23
    %v736 = vor.u32 4788187, %v735
    %v737 = vand.u32 2147483647, %v736
    %v739 = vcvt.s32.f32 %v732
    %v740 = vmul.f32 %v739, %v737
    %v741 = vxor.u32 %v740, 2147483648
    %v742 = vsel %vm659, %v741, %v740
    %v743 = vsub.s32 4, %v719
    %v744 = vsel %vm659, %v743, %v719
    %v745 = vsel %vm658, %v656, %v742
    %v746 = vsel %vm658, 0, %v744
    %v747 = vcosq.f32.pop %v745
    %v748 = vsinq.f32.pop %v745
    %vm749 = vweird.f32 %v656
    %v750 = vadd.s32 %v746, 3
    %v751 = vand.u32 %v750, 3
    %vm752 = vcmp.lt.s32.totalorder %v751, 2
    %vm753 = vcmp.eq.s32.totalorder %v751, 0
    %v754 = vxor.u32 %v748, 2147483648
    %v755 = vsel %vm753, %v747, %v754
    %vm756 = vcmp.eq.s32.totalorder %v751, 2
    %v757 = vxor.u32 %v747, 2147483648
    %v758 = vsel %vm756, %v757, %v748
    %v759 = vsel %vm752, %v755, %v758
    %v760 = vsel %vm749, nan, %v759
    %761 = vst [vmem:[#allocation5 + $0x15] sm:$0x7] %v760
    %v762 = vand.u32 2147483647, %v656
    %vm763 = vcmp.le.f32.partialorder %v762, 0.7853982
    %vm764 = vcmp.lt.s32.totalorder %v656, 0
    %v765 = vand.u32 %v656, 2139095040
    %v766 = vshrl.u32 %v765, 23
    %v767 = vsub.s32 %v766, 127
    %v768 = vand.u32 2147483647, %v656
    %v769 = vand.u32 %v768, 8388607
    %v770 = vor.u32 %v769, 8388608
    %v771 = vsub.s32 0, %v770
    %v772 = vadd.s32 %v767, 1
    %vm773 = vcmp.gt.s32.totalorder %v772, 0
    %v774 = vsel %vm773, %v772, 0
    %v775 = vshrl.u32 %v774, 5
    %v776 = vand.u32 %v774, 31
    %v777 = vsub.s32 32, %v776
    %v778 = vshrl.u32 683565275, %v777
    %v779 = vshll.u32 683565275, %v776
    %v780 = vshrl.u32 2475754826, %v777
    %v781 = vor.u32 %v779, %v780
    %v782 = vshll.u32 2475754826, %v776
    %v783 = vshrl.u32 2131351028, %v777
    %v784 = vor.u32 %v782, %v783
    %v785 = vshll.u32 2131351028, %v776
    %v786 = vshrl.u32 2102212464, %v777
    %v787 = vor.u32 %v785, %v786
    %v788 = vshll.u32 2102212464, %v776
    %v789 = vshrl.u32 920167782, %v777
    %v790 = vor.u32 %v788, %v789
    %v791 = vshll.u32 920167782, %v776
    %v792 = vshrl.u32 1326507024, %v777
    %v793 = vor.u32 %v791, %v792
    %vm794 = vcmp.lt.s32.totalorder %v775, 1
    %vm795 = vcmp.lt.s32.totalorder %v775, 2
    %vm796 = vcmp.lt.s32.totalorder %v775, 3
    %vm797 = vcmp.lt.s32.totalorder %v775, 4
    %v798 = vsel %vm794, %v778, %v781
    %v799 = vsel %vm797, %v787, 2102212464
    %v800 = vsel %vm796, %v784, %v799
    %v801 = vsel %vm795, %v798, %v800
    %v802 = vsel %vm794, %v781, %v784
    %v803 = vsel %vm797, %v790, 920167782
    %v804 = vsel %vm796, %v787, %v803
    %v805 = vsel %vm795, %v802, %v804
    %v806 = vsel %vm794, %v784, %v787
    %v807 = vsel %vm797, %v793, 1326507024
    %v808 = vsel %vm796, %v790, %v807
    %v809 = vsel %vm795, %v806, %v808
    %v810 = vshll.u32 %v770, 8
    %v811 = vmul.u32.u64.compose %v810, %v809
    %v812 = vextract.low.u32 %v811
    %v813 = vextract.high.u32 %v811
    %v814 = vmul.u32.u64.compose %v810, %v805
    %v815 = vextract.low.u32 %v814
    %v816 = vextract.high.u32 %v814
    %v817 = vmul.u32 %v810, %v801
    %v818 = vadd.s32 %v813, %v815
    %vm819 = vc.u32 %v813, %v815
    %v820 = vadd.s32 %v816, 1
    %v821 = vsel %vm819, %v820, %v816
    %v822 = vadd.s32 %v817, %v821
    %v823 = vadd.s32 %v822, 536870912
    %v824 = vshrl.u32 %v823, 30
    %v825 = vshll.u32 %v824, 30
    %v826 = vsub.s32 %v822, %v825
    %vm827 = vcmp.lt.s32.totalorder %v826, 0
    %v828 = vsub.s32 0, %v826
    %v829 = vsel %vm827, %v828, %v826
    %v830 = vclz %v829
    %v831 = vsub.s32 %v830, 2
    %vm832 = vcmp.gt.s32.totalorder 0, %v831
    %v833 = vsel %vm832, 0, %v831
    %v834 = vsub.s32 32, %v833
    %v835 = vshll.u32 %v826, %v833
    %v836 = vshrl.u32 %v818, %v834
    %v837 = vor.u32 %v835, %v836
    %v838 = vsub.s32 4294967266, %v833
    %v839 = vadd.s32 %v838, 127
    %v840 = vshll.u32 %v839, 23
    %v841 = vor.u32 4788187, %v840
    %v842 = vand.u32 2147483647, %v841
    %v844 = vcvt.s32.f32 %v837
    %v845 = vmul.f32 %v844, %v842
    %v846 = vxor.u32 %v845, 2147483648
    %v847 = vsel %vm764, %v846, %v845
    %v848 = vsub.s32 4, %v824
    %v849 = vsel %vm764, %v848, %v824
    %v850 = vsel %vm763, %v656, %v847
    %v851 = vsel %vm763, 0, %v849
    %v852 = vcosq.f32.pop %v850
    %v853 = vsinq.f32.pop %v850
    %vm854 = vweird.f32 %v656
    %v855 = vand.u32 %v851, 3
    %vm856 = vcmp.lt.s32.totalorder %v855, 2
    %vm857 = vcmp.eq.s32.totalorder %v855, 0
    %v858 = vxor.u32 %v853, 2147483648
    %v859 = vsel %vm857, %v852, %v858
    %vm860 = vcmp.eq.s32.totalorder %v855, 2
    %v861 = vxor.u32 %v852, 2147483648
    %v862 = vsel %vm860, %v861, %v853
    %v863 = vsel %vm856, %v859, %v862
    %v864 = vsel %vm854, nan, %v863
    %865 = vst [vmem:[#allocation5 + $0x18] sm:$0x7] %v864
    %v866 = vld [vmem:[#allocation2] sm:$0x7]
    %v867 = vmul.f32 %v866, 21.77264
    %v868 = vand.u32 2147483647, %v867
    %vm869 = vcmp.le.f32.partialorder %v868, 0.7853982
    %vm870 = vcmp.lt.s32.totalorder %v867, 0
    %v871 = vand.u32 %v867, 2139095040
    %v872 = vshrl.u32 %v871, 23
    %v873 = vsub.s32 %v872, 127
    %v874 = vand.u32 2147483647, %v867
    %v875 = vand.u32 %v874, 8388607
    %v876 = vor.u32 %v875, 8388608
    %v877 = vsub.s32 0, %v876
    %v878 = vadd.s32 %v873, 1
    %vm879 = vcmp.gt.s32.totalorder %v878, 0
    %v880 = vsel %vm879, %v878, 0
    %v881 = vshrl.u32 %v880, 5
    %v882 = vand.u32 %v880, 31
    %v883 = vsub.s32 32, %v882
    %v884 = vshrl.u32 683565275, %v883
    %v885 = vshll.u32 683565275, %v882
    %v886 = vshrl.u32 2475754826, %v883
    %v887 = vor.u32 %v885, %v886
    %v888 = vshll.u32 2475754826, %v882
    %v889 = vshrl.u32 2131351028, %v883
    %v890 = vor.u32 %v888, %v889
    %v891 = vshll.u32 2131351028, %v882
    %v892 = vshrl.u32 2102212464, %v883
    %v893 = vor.u32 %v891, %v892
    %v894 = vshll.u32 2102212464, %v882
    %v895 = vshrl.u32 920167782, %v883
    %v896 = vor.u32 %v894, %v895
    %v897 = vshll.u32 920167782, %v882
    %v898 = vshrl.u32 1326507024, %v883
    %v899 = vor.u32 %v897, %v898
    %vm900 = vcmp.lt.s32.totalorder %v881, 1
    %vm901 = vcmp.lt.s32.totalorder %v881, 2
    %vm902 = vcmp.lt.s32.totalorder %v881, 3
    %vm903 = vcmp.lt.s32.totalorder %v881, 4
    %v904 = vsel %vm900, %v884, %v887
    %v905 = vsel %vm903, %v893, 2102212464
    %v906 = vsel %vm902, %v890, %v905
    %v907 = vsel %vm901, %v904, %v906
    %v908 = vsel %vm900, %v887, %v890
    %v909 = vsel %vm903, %v896, 920167782
    %v910 = vsel %vm902, %v893, %v909
    %v911 = vsel %vm901, %v908, %v910
    %v912 = vsel %vm900, %v890, %v893
    %v913 = vsel %vm903, %v899, 1326507024
    %v914 = vsel %vm902, %v896, %v913
    %v915 = vsel %vm901, %v912, %v914
    %v916 = vshll.u32 %v876, 8
    %v917 = vmul.u32.u64.compose %v916, %v915
    %v918 = vextract.low.u32 %v917
    %v919 = vextract.high.u32 %v917
    %v920 = vmul.u32.u64.compose %v916, %v911
    %v921 = vextract.low.u32 %v920
    %v922 = vextract.high.u32 %v920
    %v923 = vmul.u32 %v916, %v907
    %v924 = vadd.s32 %v919, %v921
    %vm925 = vc.u32 %v919, %v921
    %v926 = vadd.s32 %v922, 1
    %v927 = vsel %vm925, %v926, %v922
    %v928 = vadd.s32 %v923, %v927
    %v929 = vadd.s32 %v928, 536870912
    %v930 = vshrl.u32 %v929, 30
    %v931 = vshll.u32 %v930, 30
    %v932 = vsub.s32 %v928, %v931
    %vm933 = vcmp.lt.s32.totalorder %v932, 0
    %v934 = vsub.s32 0, %v932
    %v935 = vsel %vm933, %v934, %v932
    %v936 = vclz %v935
    %v937 = vsub.s32 %v936, 2
    %vm938 = vcmp.gt.s32.totalorder 0, %v937
    %v939 = vsel %vm938, 0, %v937
    %v940 = vsub.s32 32, %v939
    %v941 = vshll.u32 %v932, %v939
    %v942 = vshrl.u32 %v924, %v940
    %v943 = vor.u32 %v941, %v942
    %v944 = vsub.s32 4294967266, %v939
    %v945 = vadd.s32 %v944, 127
    %v946 = vshll.u32 %v945, 23
    %v947 = vor.u32 4788187, %v946
    %v948 = vand.u32 2147483647, %v947
    %v950 = vcvt.s32.f32 %v943
    %v951 = vmul.f32 %v950, %v948
    %v952 = vxor.u32 %v951, 2147483648
    %v953 = vsel %vm870, %v952, %v951
    %v954 = vsub.s32 4, %v930
    %v955 = vsel %vm870, %v954, %v930
    %v956 = vsel %vm869, %v867, %v953
    %v957 = vsel %vm869, 0, %v955
    %v958 = vcosq.f32.pop %v956
    %v959 = vsinq.f32.pop %v956
    %vm960 = vweird.f32 %v867
    %v961 = vadd.s32 %v957, 3
    %v962 = vand.u32 %v961, 3
    %vm963 = vcmp.lt.s32.totalorder %v962, 2
    %vm964 = vcmp.eq.s32.totalorder %v962, 0
    %v965 = vxor.u32 %v959, 2147483648
    %v966 = vsel %vm964, %v958, %v965
    %vm967 = vcmp.eq.s32.totalorder %v962, 2
    %v968 = vxor.u32 %v958, 2147483648
    %v969 = vsel %vm967, %v968, %v959
    %v970 = vsel %vm963, %v966, %v969
    %v971 = vsel %vm960, nan, %v970
    %972 = vst [vmem:[#allocation5 + $0x1b] sm:$0x7] %v971
    %v973 = vand.u32 2147483647, %v867
    %vm974 = vcmp.le.f32.partialorder %v973, 0.7853982
    %vm975 = vcmp.lt.s32.totalorder %v867, 0
    %v976 = vand.u32 %v867, 2139095040
    %v977 = vshrl.u32 %v976, 23
    %v978 = vsub.s32 %v977, 127
    %v979 = vand.u32 2147483647, %v867
    %v980 = vand.u32 %v979, 8388607
    %v981 = vor.u32 %v980, 8388608
    %v982 = vsub.s32 0, %v981
    %v983 = vadd.s32 %v978, 1
    %vm984 = vcmp.gt.s32.totalorder %v983, 0
    %v985 = vsel %vm984, %v983, 0
    %v986 = vshrl.u32 %v985, 5
    %v987 = vand.u32 %v985, 31
    %v988 = vsub.s32 32, %v987
    %v989 = vshrl.u32 683565275, %v988
    %v990 = vshll.u32 683565275, %v987
    %v991 = vshrl.u32 2475754826, %v988
    %v992 = vor.u32 %v990, %v991
    %v993 = vshll.u32 2475754826, %v987
    %v994 = vshrl.u32 2131351028, %v988
    %v995 = vor.u32 %v993, %v994
    %v996 = vshll.u32 2131351028, %v987
    %v997 = vshrl.u32 2102212464, %v988
    %v998 = vor.u32 %v996, %v997
    %v999 = vshll.u32 2102212464, %v987
    %v1000 = vshrl.u32 920167782, %v988
    %v1001 = vor.u32 %v999, %v1000
    %v1002 = vshll.u32 920167782, %v987
    %v1003 = vshrl.u32 1326507024, %v988
    %v1004 = vor.u32 %v1002, %v1003
    %vm1005 = vcmp.lt.s32.totalorder %v986, 1
    %vm1006 = vcmp.lt.s32.totalorder %v986, 2
    %vm1007 = vcmp.lt.s32.totalorder %v986, 3
    %vm1008 = vcmp.lt.s32.totalorder %v986, 4
    %v1009 = vsel %vm1005, %v989, %v992
    %v1010 = vsel %vm1008, %v998, 2102212464
    %v1011 = vsel %vm1007, %v995, %v1010
    %v1012 = vsel %vm1006, %v1009, %v1011
    %v1013 = vsel %vm1005, %v992, %v995
    %v1014 = vsel %vm1008, %v1001, 920167782
    %v1015 = vsel %vm1007, %v998, %v1014
    %v1016 = vsel %vm1006, %v1013, %v1015
    %v1017 = vsel %vm1005, %v995, %v998
    %v1018 = vsel %vm1008, %v1004, 1326507024
    %v1019 = vsel %vm1007, %v1001, %v1018
    %v1020 = vsel %vm1006, %v1017, %v1019
    %v1021 = vshll.u32 %v981, 8
    %v1022 = vmul.u32.u64.compose %v1021, %v1020
    %v1023 = vextract.low.u32 %v1022
    %v1024 = vextract.high.u32 %v1022
    %v1025 = vmul.u32.u64.compose %v1021, %v1016
    %v1026 = vextract.low.u32 %v1025
    %v1027 = vextract.high.u32 %v1025
    %v1028 = vmul.u32 %v1021, %v1012
    %v1029 = vadd.s32 %v1024, %v1026
    %vm1030 = vc.u32 %v1024, %v1026
    %v1031 = vadd.s32 %v1027, 1
    %v1032 = vsel %vm1030, %v1031, %v1027
    %v1033 = vadd.s32 %v1028, %v1032
    %v1034 = vadd.s32 %v1033, 536870912
    %v1035 = vshrl.u32 %v1034, 30
    %v1036 = vshll.u32 %v1035, 30
    %v1037 = vsub.s32 %v1033, %v1036
    %vm1038 = vcmp.lt.s32.totalorder %v1037, 0
    %v1039 = vsub.s32 0, %v1037
    %v1040 = vsel %vm1038, %v1039, %v1037
    %v1041 = vclz %v1040
    %v1042 = vsub.s32 %v1041, 2
    %vm1043 = vcmp.gt.s32.totalorder 0, %v1042
    %v1044 = vsel %vm1043, 0, %v1042
    %v1045 = vsub.s32 32, %v1044
    %v1046 = vshll.u32 %v1037, %v1044
    %v1047 = vshrl.u32 %v1029, %v1045
    %v1048 = vor.u32 %v1046, %v1047
    %v1049 = vsub.s32 4294967266, %v1044
    %v1050 = vadd.s32 %v1049, 127
    %v1051 = vshll.u32 %v1050, 23
    %v1052 = vor.u32 4788187, %v1051
    %v1053 = vand.u32 2147483647, %v1052
    %v1055 = vcvt.s32.f32 %v1048
    %v1056 = vmul.f32 %v1055, %v1053
    %v1057 = vxor.u32 %v1056, 2147483648
    %v1058 = vsel %vm975, %v1057, %v1056
    %v1059 = vsub.s32 4, %v1035
    %v1060 = vsel %vm975, %v1059, %v1035
    %v1061 = vsel %vm974, %v867, %v1058
    %v1062 = vsel %vm974, 0, %v1060
    %v1063 = vcosq.f32.pop %v1061
    %v1064 = vsinq.f32.pop %v1061
    %vm1065 = vweird.f32 %v867
    %v1066 = vand.u32 %v1062, 3
    %vm1067 = vcmp.lt.s32.totalorder %v1066, 2
    %vm1068 = vcmp.eq.s32.totalorder %v1066, 0
    %v1069 = vxor.u32 %v1064, 2147483648
    %v1070 = vsel %vm1068, %v1063, %v1069
    %vm1071 = vcmp.eq.s32.totalorder %v1066, 2
    %v1072 = vxor.u32 %v1063, 2147483648
    %v1073 = vsel %vm1071, %v1072, %v1064
    %v1074 = vsel %vm1067, %v1070, %v1073
    %v1075 = vsel %vm1065, nan, %v1074
    %1076 = vst [vmem:[#allocation5 + $0x1e] sm:$0x7] %v1075
    %v1077 = vld [vmem:[#allocation2] sm:$0x7]
    %v1078 = vmul.f32 %v1077, 47.031506
    %v1079 = vand.u32 2147483647, %v1078
    %vm1080 = vcmp.le.f32.partialorder %v1079, 0.7853982
    %vm1081 = vcmp.lt.s32.totalorder %v1078, 0
    %v1082 = vand.u32 %v1078, 2139095040
    %v1083 = vshrl.u32 %v1082, 23
    %v1084 = vsub.s32 %v1083, 127
    %v1085 = vand.u32 2147483647, %v1078
    %v1086 = vand.u32 %v1085, 8388607
    %v1087 = vor.u32 %v1086, 8388608
    %v1088 = vsub.s32 0, %v1087
    %v1089 = vadd.s32 %v1084, 1
    %vm1090 = vcmp.gt.s32.totalorder %v1089, 0
    %v1091 = vsel %vm1090, %v1089, 0
    %v1092 = vshrl.u32 %v1091, 5
    %v1093 = vand.u32 %v1091, 31
    %v1094 = vsub.s32 32, %v1093
    %v1095 = vshrl.u32 683565275, %v1094
    %v1096 = vshll.u32 683565275, %v1093
    %v1097 = vshrl.u32 2475754826, %v1094
    %v1098 = vor.u32 %v1096, %v1097
    %v1099 = vshll.u32 2475754826, %v1093
    %v1100 = vshrl.u32 2131351028, %v1094
    %v1101 = vor.u32 %v1099, %v1100
    %v1102 = vshll.u32 2131351028, %v1093
    %v1103 = vshrl.u32 2102212464, %v1094
    %v1104 = vor.u32 %v1102, %v1103
    %v1105 = vshll.u32 2102212464, %v1093
    %v1106 = vshrl.u32 920167782, %v1094
    %v1107 = vor.u32 %v1105, %v1106
    %v1108 = vshll.u32 920167782, %v1093
    %v1109 = vshrl.u32 1326507024, %v1094
    %v1110 = vor.u32 %v1108, %v1109
    %vm1111 = vcmp.lt.s32.totalorder %v1092, 1
    %vm1112 = vcmp.lt.s32.totalorder %v1092, 2
    %vm1113 = vcmp.lt.s32.totalorder %v1092, 3
    %vm1114 = vcmp.lt.s32.totalorder %v1092, 4
    %v1115 = vsel %vm1111, %v1095, %v1098
    %v1116 = vsel %vm1114, %v1104, 2102212464
    %v1117 = vsel %vm1113, %v1101, %v1116
    %v1118 = vsel %vm1112, %v1115, %v1117
    %v1119 = vsel %vm1111, %v1098, %v1101
    %v1120 = vsel %vm1114, %v1107, 920167782
    %v1121 = vsel %vm1113, %v1104, %v1120
    %v1122 = vsel %vm1112, %v1119, %v1121
    %v1123 = vsel %vm1111, %v1101, %v1104
    %v1124 = vsel %vm1114, %v1110, 1326507024
    %v1125 = vsel %vm1113, %v1107, %v1124
    %v1126 = vsel %vm1112, %v1123, %v1125
    %v1127 = vshll.u32 %v1087, 8
    %v1128 = vmul.u32.u64.compose %v1127, %v1126
    %v1129 = vextract.low.u32 %v1128
    %v1130 = vextract.high.u32 %v1128
    %v1131 = vmul.u32.u64.compose %v1127, %v1122
    %v1132 = vextract.low.u32 %v1131
    %v1133 = vextract.high.u32 %v1131
    %v1134 = vmul.u32 %v1127, %v1118
    %v1135 = vadd.s32 %v1130, %v1132
    %vm1136 = vc.u32 %v1130, %v1132
    %v1137 = vadd.s32 %v1133, 1
    %v1138 = vsel %vm1136, %v1137, %v1133
    %v1139 = vadd.s32 %v1134, %v1138
    %v1140 = vadd.s32 %v1139, 536870912
    %v1141 = vshrl.u32 %v1140, 30
    %v1142 = vshll.u32 %v1141, 30
    %v1143 = vsub.s32 %v1139, %v1142
    %vm1144 = vcmp.lt.s32.totalorder %v1143, 0
    %v1145 = vsub.s32 0, %v1143
    %v1146 = vsel %vm1144, %v1145, %v1143
    %v1147 = vclz %v1146
    %v1148 = vsub.s32 %v1147, 2
    %vm1149 = vcmp.gt.s32.totalorder 0, %v1148
    %v1150 = vsel %vm1149, 0, %v1148
    %v1151 = vsub.s32 32, %v1150
    %v1152 = vshll.u32 %v1143, %v1150
    %v1153 = vshrl.u32 %v1135, %v1151
    %v1154 = vor.u32 %v1152, %v1153
    %v1155 = vsub.s32 4294967266, %v1150
    %v1156 = vadd.s32 %v1155, 127
    %v1157 = vshll.u32 %v1156, 23
    %v1158 = vor.u32 4788187, %v1157
    %v1159 = vand.u32 2147483647, %v1158
    %v1161 = vcvt.s32.f32 %v1154
    %v1162 = vmul.f32 %v1161, %v1159
    %v1163 = vxor.u32 %v1162, 2147483648
    %v1164 = vsel %vm1081, %v1163, %v1162
    %v1165 = vsub.s32 4, %v1141
    %v1166 = vsel %vm1081, %v1165, %v1141
    %v1167 = vsel %vm1080, %v1078, %v1164
    %v1168 = vsel %vm1080, 0, %v1166
    %v1169 = vcosq.f32.pop %v1167
    %v1170 = vsinq.f32.pop %v1167
    %vm1171 = vweird.f32 %v1078
    %v1172 = vadd.s32 %v1168, 3
    %v1173 = vand.u32 %v1172, 3
    %vm1174 = vcmp.lt.s32.totalorder %v1173, 2
    %vm1175 = vcmp.eq.s32.totalorder %v1173, 0
    %v1176 = vxor.u32 %v1170, 2147483648
    %v1177 = vsel %vm1175, %v1169, %v1176
    %vm1178 = vcmp.eq.s32.totalorder %v1173, 2
    %v1179 = vxor.u32 %v1169, 2147483648
    %v1180 = vsel %vm1178, %v1179, %v1170
    %v1181 = vsel %vm1174, %v1177, %v1180
    %v1182 = vsel %vm1171, nan, %v1181
    %1183 = vst [vmem:[#allocation5 + $0x21] sm:$0x7] %v1182
    %v1184 = vand.u32 2147483647, %v1078
    %vm1185 = vcmp.le.f32.partialorder %v1184, 0.7853982
    %vm1186 = vcmp.lt.s32.totalorder %v1078, 0
    %v1187 = vand.u32 %v1078, 2139095040
    %v1188 = vshrl.u32 %v1187, 23
    %v1189 = vsub.s32 %v1188, 127
    %v1190 = vand.u32 2147483647, %v1078
    %v1191 = vand.u32 %v1190, 8388607
    %v1192 = vor.u32 %v1191, 8388608
    %v1193 = vsub.s32 0, %v1192
    %v1194 = vadd.s32 %v1189, 1
    %vm1195 = vcmp.gt.s32.totalorder %v1194, 0
    %v1196 = vsel %vm1195, %v1194, 0
    %v1197 = vshrl.u32 %v1196, 5
    %v1198 = vand.u32 %v1196, 31
    %v1199 = vsub.s32 32, %v1198
    %v1200 = vshrl.u32 683565275, %v1199
    %v1201 = vshll.u32 683565275, %v1198
    %v1202 = vshrl.u32 2475754826, %v1199
    %v1203 = vor.u32 %v1201, %v1202
    %v1204 = vshll.u32 2475754826, %v1198
    %v1205 = vshrl.u32 2131351028, %v1199
    %v1206 = vor.u32 %v1204, %v1205
    %v1207 = vshll.u32 2131351028, %v1198
    %v1208 = vshrl.u32 2102212464, %v1199
    %v1209 = vor.u32 %v1207, %v1208
    %v1210 = vshll.u32 2102212464, %v1198
    %v1211 = vshrl.u32 920167782, %v1199
    %v1212 = vor.u32 %v1210, %v1211
    %v1213 = vshll.u32 920167782, %v1198
    %v1214 = vshrl.u32 1326507024, %v1199
    %v1215 = vor.u32 %v1213, %v1214
    %vm1216 = vcmp.lt.s32.totalorder %v1197, 1
    %vm1217 = vcmp.lt.s32.totalorder %v1197, 2
    %vm1218 = vcmp.lt.s32.totalorder %v1197, 3
    %vm1219 = vcmp.lt.s32.totalorder %v1197, 4
    %v1220 = vsel %vm1216, %v1200, %v1203
    %v1221 = vsel %vm1219, %v1209, 2102212464
    %v1222 = vsel %vm1218, %v1206, %v1221
    %v1223 = vsel %vm1217, %v1220, %v1222
    %v1224 = vsel %vm1216, %v1203, %v1206
    %v1225 = vsel %vm1219, %v1212, 920167782
    %v1226 = vsel %vm1218, %v1209, %v1225
    %v1227 = vsel %vm1217, %v1224, %v1226
    %v1228 = vsel %vm1216, %v1206, %v1209
    %v1229 = vsel %vm1219, %v1215, 1326507024
    %v1230 = vsel %vm1218, %v1212, %v1229
    %v1231 = vsel %vm1217, %v1228, %v1230
    %v1232 = vshll.u32 %v1192, 8
    %v1233 = vmul.u32.u64.compose %v1232, %v1231
    %v1234 = vextract.low.u32 %v1233
    %v1235 = vextract.high.u32 %v1233
    %v1236 = vmul.u32.u64.compose %v1232, %v1227
    %v1237 = vextract.low.u32 %v1236
    %v1238 = vextract.high.u32 %v1236
    %v1239 = vmul.u32 %v1232, %v1223
    %v1240 = vadd.s32 %v1235, %v1237
    %vm1241 = vc.u32 %v1235, %v1237
    %v1242 = vadd.s32 %v1238, 1
    %v1243 = vsel %vm1241, %v1242, %v1238
    %v1244 = vadd.s32 %v1239, %v1243
    %v1245 = vadd.s32 %v1244, 536870912
    %v1246 = vshrl.u32 %v1245, 30
    %v1247 = vshll.u32 %v1246, 30
    %v1248 = vsub.s32 %v1244, %v1247
    %vm1249 = vcmp.lt.s32.totalorder %v1248, 0
    %v1250 = vsub.s32 0, %v1248
    %v1251 = vsel %vm1249, %v1250, %v1248
    %v1252 = vclz %v1251
    %v1253 = vsub.s32 %v1252, 2
    %vm1254 = vcmp.gt.s32.totalorder 0, %v1253
    %v1255 = vsel %vm1254, 0, %v1253
    %v1256 = vsub.s32 32, %v1255
    %v1257 = vshll.u32 %v1248, %v1255
    %v1258 = vshrl.u32 %v1240, %v1256
    %v1259 = vor.u32 %v1257, %v1258
    %v1260 = vsub.s32 4294967266, %v1255
    %v1261 = vadd.s32 %v1260, 127
    %v1262 = vshll.u32 %v1261, 23
    %v1263 = vor.u32 4788187, %v1262
    %v1264 = vand.u32 2147483647, %v1263
    %v1266 = vcvt.s32.f32 %v1259
    %v1267 = vmul.f32 %v1266, %v1264
    %v1268 = vxor.u32 %v1267, 2147483648
    %v1269 = vsel %vm1186, %v1268, %v1267
    %v1270 = vsub.s32 4, %v1246
    %v1271 = vsel %vm1186, %v1270, %v1246
    %v1272 = vsel %vm1185, %v1078, %v1269
    %v1273 = vsel %vm1185, 0, %v1271
    %v1274 = vcosq.f32.pop %v1272
    %v1275 = vsinq.f32.pop %v1272
    %vm1276 = vweird.f32 %v1078
    %v1277 = vand.u32 %v1273, 3
    %vm1278 = vcmp.lt.s32.totalorder %v1277, 2
    %vm1279 = vcmp.eq.s32.totalorder %v1277, 0
    %v1280 = vxor.u32 %v1275, 2147483648
    %v1281 = vsel %vm1279, %v1274, %v1280
    %vm1282 = vcmp.eq.s32.totalorder %v1277, 2
    %v1283 = vxor.u32 %v1274, 2147483648
    %v1284 = vsel %vm1282, %v1283, %v1275
    %v1285 = vsel %vm1278, %v1281, %v1284
    %v1286 = vsel %vm1276, nan, %v1285
    %1287 = vst [vmem:[#allocation5 + $0x24] sm:$0x7] %v1286
    %v1288 = vld [vmem:[#allocation2] sm:$0x7]
    %v1289 = vmul.f32 %v1288, 101.593666
    %v1290 = vand.u32 2147483647, %v1289
    %vm1291 = vcmp.le.f32.partialorder %v1290, 0.7853982
    %vm1292 = vcmp.lt.s32.totalorder %v1289, 0
    %v1293 = vand.u32 %v1289, 2139095040
    %v1294 = vshrl.u32 %v1293, 23
    %v1295 = vsub.s32 %v1294, 127
    %v1296 = vand.u32 2147483647, %v1289
    %v1297 = vand.u32 %v1296, 8388607
    %v1298 = vor.u32 %v1297, 8388608
    %v1299 = vsub.s32 0, %v1298
    %v1300 = vadd.s32 %v1295, 1
    %vm1301 = vcmp.gt.s32.totalorder %v1300, 0
    %v1302 = vsel %vm1301, %v1300, 0
    %v1303 = vshrl.u32 %v1302, 5
    %v1304 = vand.u32 %v1302, 31
    %v1305 = vsub.s32 32, %v1304
    %v1306 = vshrl.u32 683565275, %v1305
    %v1307 = vshll.u32 683565275, %v1304
    %v1308 = vshrl.u32 2475754826, %v1305
    %v1309 = vor.u32 %v1307, %v1308
    %v1310 = vshll.u32 2475754826, %v1304
    %v1311 = vshrl.u32 2131351028, %v1305
    %v1312 = vor.u32 %v1310, %v1311
    %v1313 = vshll.u32 2131351028, %v1304
    %v1314 = vshrl.u32 2102212464, %v1305
    %v1315 = vor.u32 %v1313, %v1314
    %v1316 = vshll.u32 2102212464, %v1304
    %v1317 = vshrl.u32 920167782, %v1305
    %v1318 = vor.u32 %v1316, %v1317
    %v1319 = vshll.u32 920167782, %v1304
    %v1320 = vshrl.u32 1326507024, %v1305
    %v1321 = vor.u32 %v1319, %v1320
    %vm1322 = vcmp.lt.s32.totalorder %v1303, 1
    %vm1323 = vcmp.lt.s32.totalorder %v1303, 2
    %vm1324 = vcmp.lt.s32.totalorder %v1303, 3
    %vm1325 = vcmp.lt.s32.totalorder %v1303, 4
    %v1326 = vsel %vm1322, %v1306, %v1309
    %v1327 = vsel %vm1325, %v1315, 2102212464
    %v1328 = vsel %vm1324, %v1312, %v1327
    %v1329 = vsel %vm1323, %v1326, %v1328
    %v1330 = vsel %vm1322, %v1309, %v1312
    %v1331 = vsel %vm1325, %v1318, 920167782
    %v1332 = vsel %vm1324, %v1315, %v1331
    %v1333 = vsel %vm1323, %v1330, %v1332
    %v1334 = vsel %vm1322, %v1312, %v1315
    %v1335 = vsel %vm1325, %v1321, 1326507024
    %v1336 = vsel %vm1324, %v1318, %v1335
    %v1337 = vsel %vm1323, %v1334, %v1336
    %v1338 = vshll.u32 %v1298, 8
    %v1339 = vmul.u32.u64.compose %v1338, %v1337
    %v1340 = vextract.low.u32 %v1339
    %v1341 = vextract.high.u32 %v1339
    %v1342 = vmul.u32.u64.compose %v1338, %v1333
    %v1343 = vextract.low.u32 %v1342
    %v1344 = vextract.high.u32 %v1342
    %v1345 = vmul.u32 %v1338, %v1329
    %v1346 = vadd.s32 %v1341, %v1343
    %vm1347 = vc.u32 %v1341, %v1343
    %v1348 = vadd.s32 %v1344, 1
    %v1349 = vsel %vm1347, %v1348, %v1344
    %v1350 = vadd.s32 %v1345, %v1349
    %v1351 = vadd.s32 %v1350, 536870912
    %v1352 = vshrl.u32 %v1351, 30
    %v1353 = vshll.u32 %v1352, 30
    %v1354 = vsub.s32 %v1350, %v1353
    %vm1355 = vcmp.lt.s32.totalorder %v1354, 0
    %v1356 = vsub.s32 0, %v1354
    %v1357 = vsel %vm1355, %v1356, %v1354
    %v1358 = vclz %v1357
    %v1359 = vsub.s32 %v1358, 2
    %vm1360 = vcmp.gt.s32.totalorder 0, %v1359
    %v1361 = vsel %vm1360, 0, %v1359
    %v1362 = vsub.s32 32, %v1361
    %v1363 = vshll.u32 %v1354, %v1361
    %v1364 = vshrl.u32 %v1346, %v1362
    %v1365 = vor.u32 %v1363, %v1364
    %v1366 = vsub.s32 4294967266, %v1361
    %v1367 = vadd.s32 %v1366, 127
    %v1368 = vshll.u32 %v1367, 23
    %v1369 = vor.u32 4788187, %v1368
    %v1370 = vand.u32 2147483647, %v1369
    %v1372 = vcvt.s32.f32 %v1365
    %v1373 = vmul.f32 %v1372, %v1370
    %v1374 = vxor.u32 %v1373, 2147483648
    %v1375 = vsel %vm1292, %v1374, %v1373
    %v1376 = vsub.s32 4, %v1352
    %v1377 = vsel %vm1292, %v1376, %v1352
    %v1378 = vsel %vm1291, %v1289, %v1375
    %v1379 = vsel %vm1291, 0, %v1377
    %v1380 = vcosq.f32.pop %v1378
    %v1381 = vsinq.f32.pop %v1378
    %vm1382 = vweird.f32 %v1289
    %v1383 = vadd.s32 %v1379, 3
    %v1384 = vand.u32 %v1383, 3
    %vm1385 = vcmp.lt.s32.totalorder %v1384, 2
    %vm1386 = vcmp.eq.s32.totalorder %v1384, 0
    %v1387 = vxor.u32 %v1381, 2147483648
    %v1388 = vsel %vm1386, %v1380, %v1387
    %vm1389 = vcmp.eq.s32.totalorder %v1384, 2
    %v1390 = vxor.u32 %v1380, 2147483648
    %v1391 = vsel %vm1389, %v1390, %v1381
    %v1392 = vsel %vm1385, %v1388, %v1391
    %v1393 = vsel %vm1382, nan, %v1392
    %1394 = vst [vmem:[#allocation5 + $0x27] sm:$0x7] %v1393
    %v1395 = vand.u32 2147483647, %v1289
    %vm1396 = vcmp.le.f32.partialorder %v1395, 0.7853982
    %vm1397 = vcmp.lt.s32.totalorder %v1289, 0
    %v1398 = vand.u32 %v1289, 2139095040
    %v1399 = vshrl.u32 %v1398, 23
    %v1400 = vsub.s32 %v1399, 127
    %v1401 = vand.u32 2147483647, %v1289
    %v1402 = vand.u32 %v1401, 8388607
    %v1403 = vor.u32 %v1402, 8388608
    %v1404 = vsub.s32 0, %v1403
    %v1405 = vadd.s32 %v1400, 1
    %vm1406 = vcmp.gt.s32.totalorder %v1405, 0
    %v1407 = vsel %vm1406, %v1405, 0
    %v1408 = vshrl.u32 %v1407, 5
    %v1409 = vand.u32 %v1407, 31
    %v1410 = vsub.s32 32, %v1409
    %v1411 = vshrl.u32 683565275, %v1410
    %v1412 = vshll.u32 683565275, %v1409
    %v1413 = vshrl.u32 2475754826, %v1410
    %v1414 = vor.u32 %v1412, %v1413
    %v1415 = vshll.u32 2475754826, %v1409
    %v1416 = vshrl.u32 2131351028, %v1410
    %v1417 = vor.u32 %v1415, %v1416
    %v1418 = vshll.u32 2131351028, %v1409
    %v1419 = vshrl.u32 2102212464, %v1410
    %v1420 = vor.u32 %v1418, %v1419
    %v1421 = vshll.u32 2102212464, %v1409
    %v1422 = vshrl.u32 920167782, %v1410
    %v1423 = vor.u32 %v1421, %v1422
    %v1424 = vshll.u32 920167782, %v1409
    %v1425 = vshrl.u32 1326507024, %v1410
    %v1426 = vor.u32 %v1424, %v1425
    %vm1427 = vcmp.lt.s32.totalorder %v1408, 1
    %vm1428 = vcmp.lt.s32.totalorder %v1408, 2
    %vm1429 = vcmp.lt.s32.totalorder %v1408, 3
    %vm1430 = vcmp.lt.s32.totalorder %v1408, 4
    %v1431 = vsel %vm1427, %v1411, %v1414
    %v1432 = vsel %vm1430, %v1420, 2102212464
    %v1433 = vsel %vm1429, %v1417, %v1432
    %v1434 = vsel %vm1428, %v1431, %v1433
    %v1435 = vsel %vm1427, %v1414, %v1417
    %v1436 = vsel %vm1430, %v1423, 920167782
    %v1437 = vsel %vm1429, %v1420, %v1436
    %v1438 = vsel %vm1428, %v1435, %v1437
    %v1439 = vsel %vm1427, %v1417, %v1420
    %v1440 = vsel %vm1430, %v1426, 1326507024
    %v1441 = vsel %vm1429, %v1423, %v1440
    %v1442 = vsel %vm1428, %v1439, %v1441
    %v1443 = vshll.u32 %v1403, 8
    %v1444 = vmul.u32.u64.compose %v1443, %v1442
    %v1445 = vextract.low.u32 %v1444
    %v1446 = vextract.high.u32 %v1444
    %v1447 = vmul.u32.u64.compose %v1443, %v1438
    %v1448 = vextract.low.u32 %v1447
    %v1449 = vextract.high.u32 %v1447
    %v1450 = vmul.u32 %v1443, %v1434
    %v1451 = vadd.s32 %v1446, %v1448
    %vm1452 = vc.u32 %v1446, %v1448
    %v1453 = vadd.s32 %v1449, 1
    %v1454 = vsel %vm1452, %v1453, %v1449
    %v1455 = vadd.s32 %v1450, %v1454
    %v1456 = vadd.s32 %v1455, 536870912
    %v1457 = vshrl.u32 %v1456, 30
    %v1458 = vshll.u32 %v1457, 30
    %v1459 = vsub.s32 %v1455, %v1458
    %vm1460 = vcmp.lt.s32.totalorder %v1459, 0
    %v1461 = vsub.s32 0, %v1459
    %v1462 = vsel %vm1460, %v1461, %v1459
    %v1463 = vclz %v1462
    %v1464 = vsub.s32 %v1463, 2
    %vm1465 = vcmp.gt.s32.totalorder 0, %v1464
    %v1466 = vsel %vm1465, 0, %v1464
    %v1467 = vsub.s32 32, %v1466
    %v1468 = vshll.u32 %v1459, %v1466
    %v1469 = vshrl.u32 %v1451, %v1467
    %v1470 = vor.u32 %v1468, %v1469
    %v1471 = vsub.s32 4294967266, %v1466
    %v1472 = vadd.s32 %v1471, 127
    %v1473 = vshll.u32 %v1472, 23
    %v1474 = vor.u32 4788187, %v1473
    %v1475 = vand.u32 2147483647, %v1474
    %v1477 = vcvt.s32.f32 %v1470
    %v1478 = vmul.f32 %v1477, %v1475
    %v1479 = vxor.u32 %v1478, 2147483648
    %v1480 = vsel %vm1397, %v1479, %v1478
    %v1481 = vsub.s32 4, %v1457
    %v1482 = vsel %vm1397, %v1481, %v1457
    %v1483 = vsel %vm1396, %v1289, %v1480
    %v1484 = vsel %vm1396, 0, %v1482
    %v1485 = vcosq.f32.pop %v1483
    %v1486 = vsinq.f32.pop %v1483
    %vm1487 = vweird.f32 %v1289
    %v1488 = vand.u32 %v1484, 3
    %vm1489 = vcmp.lt.s32.totalorder %v1488, 2
    %vm1490 = vcmp.eq.s32.totalorder %v1488, 0
    %v1491 = vxor.u32 %v1486, 2147483648
    %v1492 = vsel %vm1490, %v1485, %v1491
    %vm1493 = vcmp.eq.s32.totalorder %v1488, 2
    %v1494 = vxor.u32 %v1485, 2147483648
    %v1495 = vsel %vm1493, %v1494, %v1486
    %v1496 = vsel %vm1489, %v1492, %v1495
    %v1497 = vsel %vm1487, nan, %v1496
    %1498 = vst [vmem:[#allocation5 + $0x2a] sm:$0x7] %v1497
    %v1499 = vld [vmem:[#allocation2] sm:$0x7]
    %v1500 = vmul.f32 %v1499, 219.45445
    %v1501 = vand.u32 2147483647, %v1500
    %vm1502 = vcmp.le.f32.partialorder %v1501, 0.7853982
    %vm1503 = vcmp.lt.s32.totalorder %v1500, 0
    %v1504 = vand.u32 %v1500, 2139095040
    %v1505 = vshrl.u32 %v1504, 23
    %v1506 = vsub.s32 %v1505, 127
    %v1507 = vand.u32 2147483647, %v1500
    %v1508 = vand.u32 %v1507, 8388607
    %v1509 = vor.u32 %v1508, 8388608
    %v1510 = vsub.s32 0, %v1509
    %v1511 = vadd.s32 %v1506, 1
    %vm1512 = vcmp.gt.s32.totalorder %v1511, 0
    %v1513 = vsel %vm1512, %v1511, 0
    %v1514 = vshrl.u32 %v1513, 5
    %v1515 = vand.u32 %v1513, 31
    %v1516 = vsub.s32 32, %v1515
    %v1517 = vshrl.u32 683565275, %v1516
    %v1518 = vshll.u32 683565275, %v1515
    %v1519 = vshrl.u32 2475754826, %v1516
    %v1520 = vor.u32 %v1518, %v1519
    %v1521 = vshll.u32 2475754826, %v1515
    %v1522 = vshrl.u32 2131351028, %v1516
    %v1523 = vor.u32 %v1521, %v1522
    %v1524 = vshll.u32 2131351028, %v1515
    %v1525 = vshrl.u32 2102212464, %v1516
    %v1526 = vor.u32 %v1524, %v1525
    %v1527 = vshll.u32 2102212464, %v1515
    %v1528 = vshrl.u32 920167782, %v1516
    %v1529 = vor.u32 %v1527, %v1528
    %v1530 = vshll.u32 920167782, %v1515
    %v1531 = vshrl.u32 1326507024, %v1516
    %v1532 = vor.u32 %v1530, %v1531
    %vm1533 = vcmp.lt.s32.totalorder %v1514, 1
    %vm1534 = vcmp.lt.s32.totalorder %v1514, 2
    %vm1535 = vcmp.lt.s32.totalorder %v1514, 3
    %vm1536 = vcmp.lt.s32.totalorder %v1514, 4
    %v1537 = vsel %vm1533, %v1517, %v1520
    %v1538 = vsel %vm1536, %v1526, 2102212464
    %v1539 = vsel %vm1535, %v1523, %v1538
    %v1540 = vsel %vm1534, %v1537, %v1539
    %v1541 = vsel %vm1533, %v1520, %v1523
    %v1542 = vsel %vm1536, %v1529, 920167782
    %v1543 = vsel %vm1535, %v1526, %v1542
    %v1544 = vsel %vm1534, %v1541, %v1543
    %v1545 = vsel %vm1533, %v1523, %v1526
    %v1546 = vsel %vm1536, %v1532, 1326507024
    %v1547 = vsel %vm1535, %v1529, %v1546
    %v1548 = vsel %vm1534, %v1545, %v1547
    %v1549 = vshll.u32 %v1509, 8
    %v1550 = vmul.u32.u64.compose %v1549, %v1548
    %v1551 = vextract.low.u32 %v1550
    %v1552 = vextract.high.u32 %v1550
    %v1553 = vmul.u32.u64.compose %v1549, %v1544
    %v1554 = vextract.low.u32 %v1553
    %v1555 = vextract.high.u32 %v1553
    %v1556 = vmul.u32 %v1549, %v1540
    %v1557 = vadd.s32 %v1552, %v1554
    %vm1558 = vc.u32 %v1552, %v1554
    %v1559 = vadd.s32 %v1555, 1
    %v1560 = vsel %vm1558, %v1559, %v1555
    %v1561 = vadd.s32 %v1556, %v1560
    %v1562 = vadd.s32 %v1561, 536870912
    %v1563 = vshrl.u32 %v1562, 30
    %v1564 = vshll.u32 %v1563, 30
    %v1565 = vsub.s32 %v1561, %v1564
    %vm1566 = vcmp.lt.s32.totalorder %v1565, 0
    %v1567 = vsub.s32 0, %v1565
    %v1568 = vsel %vm1566, %v1567, %v1565
    %v1569 = vclz %v1568
    %v1570 = vsub.s32 %v1569, 2
    %vm1571 = vcmp.gt.s32.totalorder 0, %v1570
    %v1572 = vsel %vm1571, 0, %v1570
    %v1573 = vsub.s32 32, %v1572
    %v1574 = vshll.u32 %v1565, %v1572
    %v1575 = vshrl.u32 %v1557, %v1573
    %v1576 = vor.u32 %v1574, %v1575
    %v1577 = vsub.s32 4294967266, %v1572
    %v1578 = vadd.s32 %v1577, 127
    %v1579 = vshll.u32 %v1578, 23
    %v1580 = vor.u32 4788187, %v1579
    %v1581 = vand.u32 2147483647, %v1580
    %v1583 = vcvt.s32.f32 %v1576
    %v1584 = vmul.f32 %v1583, %v1581
    %v1585 = vxor.u32 %v1584, 2147483648
    %v1586 = vsel %vm1503, %v1585, %v1584
    %v1587 = vsub.s32 4, %v1563
    %v1588 = vsel %vm1503, %v1587, %v1563
    %v1589 = vsel %vm1502, %v1500, %v1586
    %v1590 = vsel %vm1502, 0, %v1588
    %v1591 = vcosq.f32.pop %v1589
    %v1592 = vsinq.f32.pop %v1589
    %vm1593 = vweird.f32 %v1500
    %v1594 = vadd.s32 %v1590, 3
    %v1595 = vand.u32 %v1594, 3
    %vm1596 = vcmp.lt.s32.totalorder %v1595, 2
    %vm1597 = vcmp.eq.s32.totalorder %v1595, 0
    %v1598 = vxor.u32 %v1592, 2147483648
    %v1599 = vsel %vm1597, %v1591, %v1598
    %vm1600 = vcmp.eq.s32.totalorder %v1595, 2
    %v1601 = vxor.u32 %v1591, 2147483648
    %v1602 = vsel %vm1600, %v1601, %v1592
    %v1603 = vsel %vm1596, %v1599, %v1602
    %v1604 = vsel %vm1593, nan, %v1603
    %1605 = vst [vmem:[#allocation5 + $0x2d] sm:$0x7] %v1604
    %v1606 = vand.u32 2147483647, %v1500
    %vm1607 = vcmp.le.f32.partialorder %v1606, 0.7853982
    %vm1608 = vcmp.lt.s32.totalorder %v1500, 0
    %v1609 = vand.u32 %v1500, 2139095040
    %v1610 = vshrl.u32 %v1609, 23
    %v1611 = vsub.s32 %v1610, 127
    %v1612 = vand.u32 2147483647, %v1500
    %v1613 = vand.u32 %v1612, 8388607
    %v1614 = vor.u32 %v1613, 8388608
    %v1615 = vsub.s32 0, %v1614
    %v1616 = vadd.s32 %v1611, 1
    %vm1617 = vcmp.gt.s32.totalorder %v1616, 0
    %v1618 = vsel %vm1617, %v1616, 0
    %v1619 = vshrl.u32 %v1618, 5
    %v1620 = vand.u32 %v1618, 31
    %v1621 = vsub.s32 32, %v1620
    %v1622 = vshrl.u32 683565275, %v1621
    %v1623 = vshll.u32 683565275, %v1620
    %v1624 = vshrl.u32 2475754826, %v1621
    %v1625 = vor.u32 %v1623, %v1624
    %v1626 = vshll.u32 2475754826, %v1620
    %v1627 = vshrl.u32 2131351028, %v1621
    %v1628 = vor.u32 %v1626, %v1627
    %v1629 = vshll.u32 2131351028, %v1620
    %v1630 = vshrl.u32 2102212464, %v1621
    %v1631 = vor.u32 %v1629, %v1630
    %v1632 = vshll.u32 2102212464, %v1620
    %v1633 = vshrl.u32 920167782, %v1621
    %v1634 = vor.u32 %v1632, %v1633
    %v1635 = vshll.u32 920167782, %v1620
    %v1636 = vshrl.u32 1326507024, %v1621
    %v1637 = vor.u32 %v1635, %v1636
    %vm1638 = vcmp.lt.s32.totalorder %v1619, 1
    %vm1639 = vcmp.lt.s32.totalorder %v1619, 2
    %vm1640 = vcmp.lt.s32.totalorder %v1619, 3
    %vm1641 = vcmp.lt.s32.totalorder %v1619, 4
    %v1642 = vsel %vm1638, %v1622, %v1625
    %v1643 = vsel %vm1641, %v1631, 2102212464
    %v1644 = vsel %vm1640, %v1628, %v1643
    %v1645 = vsel %vm1639, %v1642, %v1644
    %v1646 = vsel %vm1638, %v1625, %v1628
    %v1647 = vsel %vm1641, %v1634, 920167782
    %v1648 = vsel %vm1640, %v1631, %v1647
    %v1649 = vsel %vm1639, %v1646, %v1648
    %v1650 = vsel %vm1638, %v1628, %v1631
    %v1651 = vsel %vm1641, %v1637, 1326507024
    %v1652 = vsel %vm1640, %v1634, %v1651
    %v1653 = vsel %vm1639, %v1650, %v1652
    %v1654 = vshll.u32 %v1614, 8
    %v1655 = vmul.u32.u64.compose %v1654, %v1653
    %v1656 = vextract.low.u32 %v1655
    %v1657 = vextract.high.u32 %v1655
    %v1658 = vmul.u32.u64.compose %v1654, %v1649
    %v1659 = vextract.low.u32 %v1658
    %v1660 = vextract.high.u32 %v1658
    %v1661 = vmul.u32 %v1654, %v1645
    %v1662 = vadd.s32 %v1657, %v1659
    %vm1663 = vc.u32 %v1657, %v1659
    %v1664 = vadd.s32 %v1660, 1
    %v1665 = vsel %vm1663, %v1664, %v1660
    %v1666 = vadd.s32 %v1661, %v1665
    %v1667 = vadd.s32 %v1666, 536870912
    %v1668 = vshrl.u32 %v1667, 30
    %v1669 = vshll.u32 %v1668, 30
    %v1670 = vsub.s32 %v1666, %v1669
    %vm1671 = vcmp.lt.s32.totalorder %v1670, 0
    %v1672 = vsub.s32 0, %v1670
    %v1673 = vsel %vm1671, %v1672, %v1670
    %v1674 = vclz %v1673
    %v1675 = vsub.s32 %v1674, 2
    %vm1676 = vcmp.gt.s32.totalorder 0, %v1675
    %v1677 = vsel %vm1676, 0, %v1675
    %v1678 = vsub.s32 32, %v1677
    %v1679 = vshll.u32 %v1670, %v1677
    %v1680 = vshrl.u32 %v1662, %v1678
    %v1681 = vor.u32 %v1679, %v1680
    %v1682 = vsub.s32 4294967266, %v1677
    %v1683 = vadd.s32 %v1682, 127
    %v1684 = vshll.u32 %v1683, 23
    %v1685 = vor.u32 4788187, %v1684
    %v1686 = vand.u32 2147483647, %v1685
    %v1688 = vcvt.s32.f32 %v1681
    %v1689 = vmul.f32 %v1688, %v1686
    %v1690 = vxor.u32 %v1689, 2147483648
    %v1691 = vsel %vm1608, %v1690, %v1689
    %v1692 = vsub.s32 4, %v1668
    %v1693 = vsel %vm1608, %v1692, %v1668
    %v1694 = vsel %vm1607, %v1500, %v1691
    %v1695 = vsel %vm1607, 0, %v1693
    %v1696 = vcosq.f32.pop %v1694
    %v1697 = vsinq.f32.pop %v1694
    %vm1698 = vweird.f32 %v1500
    %v1699 = vand.u32 %v1695, 3
    %vm1700 = vcmp.lt.s32.totalorder %v1699, 2
    %vm1701 = vcmp.eq.s32.totalorder %v1699, 0
    %v1702 = vxor.u32 %v1697, 2147483648
    %v1703 = vsel %vm1701, %v1696, %v1702
    %vm1704 = vcmp.eq.s32.totalorder %v1699, 2
    %v1705 = vxor.u32 %v1696, 2147483648
    %v1706 = vsel %vm1704, %v1705, %v1697
    %v1707 = vsel %vm1700, %v1703, %v1706
    %v1708 = vsel %vm1698, nan, %v1707
    %1709 = vst [vmem:[#allocation5 + $0x30] sm:$0x7] %v1708
    %v1710 = vld [vmem:[#allocation2] sm:$0x7]
    %v1711 = vmul.f32 %v1710, 474.04785
    %v1712 = vand.u32 2147483647, %v1711
    %vm1713 = vcmp.le.f32.partialorder %v1712, 0.7853982
    %vm1714 = vcmp.lt.s32.totalorder %v1711, 0
    %v1715 = vand.u32 %v1711, 2139095040
    %v1716 = vshrl.u32 %v1715, 23
    %v1717 = vsub.s32 %v1716, 127
    %v1718 = vand.u32 2147483647, %v1711
    %v1719 = vand.u32 %v1718, 8388607
    %v1720 = vor.u32 %v1719, 8388608
    %v1721 = vsub.s32 0, %v1720
    %v1722 = vadd.s32 %v1717, 1
    %vm1723 = vcmp.gt.s32.totalorder %v1722, 0
    %v1724 = vsel %vm1723, %v1722, 0
    %v1725 = vshrl.u32 %v1724, 5
    %v1726 = vand.u32 %v1724, 31
    %v1727 = vsub.s32 32, %v1726
    %v1728 = vshrl.u32 683565275, %v1727
    %v1729 = vshll.u32 683565275, %v1726
    %v1730 = vshrl.u32 2475754826, %v1727
    %v1731 = vor.u32 %v1729, %v1730
    %v1732 = vshll.u32 2475754826, %v1726
    %v1733 = vshrl.u32 2131351028, %v1727
    %v1734 = vor.u32 %v1732, %v1733
    %v1735 = vshll.u32 2131351028, %v1726
    %v1736 = vshrl.u32 2102212464, %v1727
    %v1737 = vor.u32 %v1735, %v1736
    %v1738 = vshll.u32 2102212464, %v1726
    %v1739 = vshrl.u32 920167782, %v1727
    %v1740 = vor.u32 %v1738, %v1739
    %v1741 = vshll.u32 920167782, %v1726
    %v1742 = vshrl.u32 1326507024, %v1727
    %v1743 = vor.u32 %v1741, %v1742
    %vm1744 = vcmp.lt.s32.totalorder %v1725, 1
    %vm1745 = vcmp.lt.s32.totalorder %v1725, 2
    %vm1746 = vcmp.lt.s32.totalorder %v1725, 3
    %vm1747 = vcmp.lt.s32.totalorder %v1725, 4
    %v1748 = vsel %vm1744, %v1728, %v1731
    %v1749 = vsel %vm1747, %v1737, 2102212464
    %v1750 = vsel %vm1746, %v1734, %v1749
    %v1751 = vsel %vm1745, %v1748, %v1750
    %v1752 = vsel %vm1744, %v1731, %v1734
    %v1753 = vsel %vm1747, %v1740, 920167782
    %v1754 = vsel %vm1746, %v1737, %v1753
    %v1755 = vsel %vm1745, %v1752, %v1754
    %v1756 = vsel %vm1744, %v1734, %v1737
    %v1757 = vsel %vm1747, %v1743, 1326507024
    %v1758 = vsel %vm1746, %v1740, %v1757
    %v1759 = vsel %vm1745, %v1756, %v1758
    %v1760 = vshll.u32 %v1720, 8
    %v1761 = vmul.u32.u64.compose %v1760, %v1759
    %v1762 = vextract.low.u32 %v1761
    %v1763 = vextract.high.u32 %v1761
    %v1764 = vmul.u32.u64.compose %v1760, %v1755
    %v1765 = vextract.low.u32 %v1764
    %v1766 = vextract.high.u32 %v1764
    %v1767 = vmul.u32 %v1760, %v1751
    %v1768 = vadd.s32 %v1763, %v1765
    %vm1769 = vc.u32 %v1763, %v1765
    %v1770 = vadd.s32 %v1766, 1
    %v1771 = vsel %vm1769, %v1770, %v1766
    %v1772 = vadd.s32 %v1767, %v1771
    %v1773 = vadd.s32 %v1772, 536870912
    %v1774 = vshrl.u32 %v1773, 30
    %v1775 = vshll.u32 %v1774, 30
    %v1776 = vsub.s32 %v1772, %v1775
    %vm1777 = vcmp.lt.s32.totalorder %v1776, 0
    %v1778 = vsub.s32 0, %v1776
    %v1779 = vsel %vm1777, %v1778, %v1776
    %v1780 = vclz %v1779
    %v1781 = vsub.s32 %v1780, 2
    %vm1782 = vcmp.gt.s32.totalorder 0, %v1781
    %v1783 = vsel %vm1782, 0, %v1781
    %v1784 = vsub.s32 32, %v1783
    %v1785 = vshll.u32 %v1776, %v1783
    %v1786 = vshrl.u32 %v1768, %v1784
    %v1787 = vor.u32 %v1785, %v1786
    %v1788 = vsub.s32 4294967266, %v1783
    %v1789 = vadd.s32 %v1788, 127
    %v1790 = vshll.u32 %v1789, 23
    %v1791 = vor.u32 4788187, %v1790
    %v1792 = vand.u32 2147483647, %v1791
    %v1794 = vcvt.s32.f32 %v1787
    %v1795 = vmul.f32 %v1794, %v1792
    %v1796 = vxor.u32 %v1795, 2147483648
    %v1797 = vsel %vm1714, %v1796, %v1795
    %v1798 = vsub.s32 4, %v1774
    %v1799 = vsel %vm1714, %v1798, %v1774
    %v1800 = vsel %vm1713, %v1711, %v1797
    %v1801 = vsel %vm1713, 0, %v1799
    %v1802 = vcosq.f32.pop %v1800
    %v1803 = vsinq.f32.pop %v1800
    %vm1804 = vweird.f32 %v1711
    %v1805 = vadd.s32 %v1801, 3
    %v1806 = vand.u32 %v1805, 3
    %vm1807 = vcmp.lt.s32.totalorder %v1806, 2
    %vm1808 = vcmp.eq.s32.totalorder %v1806, 0
    %v1809 = vxor.u32 %v1803, 2147483648
    %v1810 = vsel %vm1808, %v1802, %v1809
    %vm1811 = vcmp.eq.s32.totalorder %v1806, 2
    %v1812 = vxor.u32 %v1802, 2147483648
    %v1813 = vsel %vm1811, %v1812, %v1803
    %v1814 = vsel %vm1807, %v1810, %v1813
    %v1815 = vsel %vm1804, nan, %v1814
    %1816 = vst [vmem:[#allocation5 + $0x33] sm:$0x7] %v1815
    %v1817 = vand.u32 2147483647, %v1711
    %vm1818 = vcmp.le.f32.partialorder %v1817, 0.7853982
    %vm1819 = vcmp.lt.s32.totalorder %v1711, 0
    %v1820 = vand.u32 %v1711, 2139095040
    %v1821 = vshrl.u32 %v1820, 23
    %v1822 = vsub.s32 %v1821, 127
    %v1823 = vand.u32 2147483647, %v1711
    %v1824 = vand.u32 %v1823, 8388607
    %v1825 = vor.u32 %v1824, 8388608
    %v1826 = vsub.s32 0, %v1825
    %v1827 = vadd.s32 %v1822, 1
    %vm1828 = vcmp.gt.s32.totalorder %v1827, 0
    %v1829 = vsel %vm1828, %v1827, 0
    %v1830 = vshrl.u32 %v1829, 5
    %v1831 = vand.u32 %v1829, 31
    %v1832 = vsub.s32 32, %v1831
    %v1833 = vshrl.u32 683565275, %v1832
    %v1834 = vshll.u32 683565275, %v1831
    %v1835 = vshrl.u32 2475754826, %v1832
    %v1836 = vor.u32 %v1834, %v1835
    %v1837 = vshll.u32 2475754826, %v1831
    %v1838 = vshrl.u32 2131351028, %v1832
    %v1839 = vor.u32 %v1837, %v1838
    %v1840 = vshll.u32 2131351028, %v1831
    %v1841 = vshrl.u32 2102212464, %v1832
    %v1842 = vor.u32 %v1840, %v1841
    %v1843 = vshll.u32 2102212464, %v1831
    %v1844 = vshrl.u32 920167782, %v1832
    %v1845 = vor.u32 %v1843, %v1844
    %v1846 = vshll.u32 920167782, %v1831
    %v1847 = vshrl.u32 1326507024, %v1832
    %v1848 = vor.u32 %v1846, %v1847
    %vm1849 = vcmp.lt.s32.totalorder %v1830, 1
    %vm1850 = vcmp.lt.s32.totalorder %v1830, 2
    %vm1851 = vcmp.lt.s32.totalorder %v1830, 3
    %vm1852 = vcmp.lt.s32.totalorder %v1830, 4
    %v1853 = vsel %vm1849, %v1833, %v1836
    %v1854 = vsel %vm1852, %v1842, 2102212464
    %v1855 = vsel %vm1851, %v1839, %v1854
    %v1856 = vsel %vm1850, %v1853, %v1855
    %v1857 = vsel %vm1849, %v1836, %v1839
    %v1858 = vsel %vm1852, %v1845, 920167782
    %v1859 = vsel %vm1851, %v1842, %v1858
    %v1860 = vsel %vm1850, %v1857, %v1859
    %v1861 = vsel %vm1849, %v1839, %v1842
    %v1862 = vsel %vm1852, %v1848, 1326507024
    %v1863 = vsel %vm1851, %v1845, %v1862
    %v1864 = vsel %vm1850, %v1861, %v1863
    %v1865 = vshll.u32 %v1825, 8
    %v1866 = vmul.u32.u64.compose %v1865, %v1864
    %v1867 = vextract.low.u32 %v1866
    %v1868 = vextract.high.u32 %v1866
    %v1869 = vmul.u32.u64.compose %v1865, %v1860
    %v1870 = vextract.low.u32 %v1869
    %v1871 = vextract.high.u32 %v1869
    %v1872 = vmul.u32 %v1865, %v1856
    %v1873 = vadd.s32 %v1868, %v1870
    %vm1874 = vc.u32 %v1868, %v1870
    %v1875 = vadd.s32 %v1871, 1
    %v1876 = vsel %vm1874, %v1875, %v1871
    %v1877 = vadd.s32 %v1872, %v1876
    %v1878 = vadd.s32 %v1877, 536870912
    %v1879 = vshrl.u32 %v1878, 30
    %v1880 = vshll.u32 %v1879, 30
    %v1881 = vsub.s32 %v1877, %v1880
    %vm1882 = vcmp.lt.s32.totalorder %v1881, 0
    %v1883 = vsub.s32 0, %v1881
    %v1884 = vsel %vm1882, %v1883, %v1881
    %v1885 = vclz %v1884
    %v1886 = vsub.s32 %v1885, 2
    %vm1887 = vcmp.gt.s32.totalorder 0, %v1886
    %v1888 = vsel %vm1887, 0, %v1886
    %v1889 = vsub.s32 32, %v1888
    %v1890 = vshll.u32 %v1881, %v1888
    %v1891 = vshrl.u32 %v1873, %v1889
    %v1892 = vor.u32 %v1890, %v1891
    %v1893 = vsub.s32 4294967266, %v1888
    %v1894 = vadd.s32 %v1893, 127
    %v1895 = vshll.u32 %v1894, 23
    %v1896 = vor.u32 4788187, %v1895
    %v1897 = vand.u32 2147483647, %v1896
    %v1899 = vcvt.s32.f32 %v1892
    %v1900 = vmul.f32 %v1899, %v1897
    %v1901 = vxor.u32 %v1900, 2147483648
    %v1902 = vsel %vm1819, %v1901, %v1900
    %v1903 = vsub.s32 4, %v1879
    %v1904 = vsel %vm1819, %v1903, %v1879
    %v1905 = vsel %vm1818, %v1711, %v1902
    %v1906 = vsel %vm1818, 0, %v1904
    %v1907 = vcosq.f32.pop %v1905
    %v1908 = vsinq.f32.pop %v1905
    %vm1909 = vweird.f32 %v1711
    %v1910 = vand.u32 %v1906, 3
    %vm1911 = vcmp.lt.s32.totalorder %v1910, 2
    %vm1912 = vcmp.eq.s32.totalorder %v1910, 0
    %v1913 = vxor.u32 %v1908, 2147483648
    %v1914 = vsel %vm1912, %v1907, %v1913
    %vm1915 = vcmp.eq.s32.totalorder %v1910, 2
    %v1916 = vxor.u32 %v1907, 2147483648
    %v1917 = vsel %vm1915, %v1916, %v1908
    %v1918 = vsel %vm1911, %v1914, %v1917
    %v1919 = vsel %vm1909, nan, %v1918
    %1920 = vst [vmem:[#allocation5 + $0x36] sm:$0x7] %v1919
    %v1921 = vld [vmem:[#allocation2] sm:$0x7]
    %v1922 = vmul.f32 %v1921, 1024.0
    %v1923 = vand.u32 2147483647, %v1922
    %vm1924 = vcmp.le.f32.partialorder %v1923, 0.7853982
    %vm1925 = vcmp.lt.s32.totalorder %v1922, 0
    %v1926 = vand.u32 %v1922, 2139095040
    %v1927 = vshrl.u32 %v1926, 23
    %v1928 = vsub.s32 %v1927, 127
    %v1929 = vand.u32 2147483647, %v1922
    %v1930 = vand.u32 %v1929, 8388607
    %v1931 = vor.u32 %v1930, 8388608
    %v1932 = vsub.s32 0, %v1931
    %v1933 = vadd.s32 %v1928, 1
    %vm1934 = vcmp.gt.s32.totalorder %v1933, 0
    %v1935 = vsel %vm1934, %v1933, 0
    %v1936 = vshrl.u32 %v1935, 5
    %v1937 = vand.u32 %v1935, 31
    %v1938 = vsub.s32 32, %v1937
    %v1939 = vshrl.u32 683565275, %v1938
    %v1940 = vshll.u32 683565275, %v1937
    %v1941 = vshrl.u32 2475754826, %v1938
    %v1942 = vor.u32 %v1940, %v1941
    %v1943 = vshll.u32 2475754826, %v1937
    %v1944 = vshrl.u32 2131351028, %v1938
    %v1945 = vor.u32 %v1943, %v1944
    %v1946 = vshll.u32 2131351028, %v1937
    %v1947 = vshrl.u32 2102212464, %v1938
    %v1948 = vor.u32 %v1946, %v1947
    %v1949 = vshll.u32 2102212464, %v1937
    %v1950 = vshrl.u32 920167782, %v1938
    %v1951 = vor.u32 %v1949, %v1950
    %v1952 = vshll.u32 920167782, %v1937
    %v1953 = vshrl.u32 1326507024, %v1938
    %v1954 = vor.u32 %v1952, %v1953
    %vm1955 = vcmp.lt.s32.totalorder %v1936, 1
    %vm1956 = vcmp.lt.s32.totalorder %v1936, 2
    %vm1957 = vcmp.lt.s32.totalorder %v1936, 3
    %vm1958 = vcmp.lt.s32.totalorder %v1936, 4
    %v1959 = vsel %vm1955, %v1939, %v1942
    %v1960 = vsel %vm1958, %v1948, 2102212464
    %v1961 = vsel %vm1957, %v1945, %v1960
    %v1962 = vsel %vm1956, %v1959, %v1961
    %v1963 = vsel %vm1955, %v1942, %v1945
    %v1964 = vsel %vm1958, %v1951, 920167782
    %v1965 = vsel %vm1957, %v1948, %v1964
    %v1966 = vsel %vm1956, %v1963, %v1965
    %v1967 = vsel %vm1955, %v1945, %v1948
    %v1968 = vsel %vm1958, %v1954, 1326507024
    %v1969 = vsel %vm1957, %v1951, %v1968
    %v1970 = vsel %vm1956, %v1967, %v1969
    %v1971 = vshll.u32 %v1931, 8
    %v1972 = vmul.u32.u64.compose %v1971, %v1970
    %v1973 = vextract.low.u32 %v1972
    %v1974 = vextract.high.u32 %v1972
    %v1975 = vmul.u32.u64.compose %v1971, %v1966
    %v1976 = vextract.low.u32 %v1975
    %v1977 = vextract.high.u32 %v1975
    %v1978 = vmul.u32 %v1971, %v1962
    %v1979 = vadd.s32 %v1974, %v1976
    %vm1980 = vc.u32 %v1974, %v1976
    %v1981 = vadd.s32 %v1977, 1
    %v1982 = vsel %vm1980, %v1981, %v1977
    %v1983 = vadd.s32 %v1978, %v1982
    %v1984 = vadd.s32 %v1983, 536870912
    %v1985 = vshrl.u32 %v1984, 30
    %v1986 = vshll.u32 %v1985, 30
    %v1987 = vsub.s32 %v1983, %v1986
    %vm1988 = vcmp.lt.s32.totalorder %v1987, 0
    %v1989 = vsub.s32 0, %v1987
    %v1990 = vsel %vm1988, %v1989, %v1987
    %v1991 = vclz %v1990
    %v1992 = vsub.s32 %v1991, 2
    %vm1993 = vcmp.gt.s32.totalorder 0, %v1992
    %v1994 = vsel %vm1993, 0, %v1992
    %v1995 = vsub.s32 32, %v1994
    %v1996 = vshll.u32 %v1987, %v1994
    %v1997 = vshrl.u32 %v1979, %v1995
    %v1998 = vor.u32 %v1996, %v1997
    %v1999 = vsub.s32 4294967266, %v1994
    %v2000 = vadd.s32 %v1999, 127
    %v2001 = vshll.u32 %v2000, 23
    %v2002 = vor.u32 4788187, %v2001
    %v2003 = vand.u32 2147483647, %v2002
    %v2005 = vcvt.s32.f32 %v1998
    %v2006 = vmul.f32 %v2005, %v2003
    %v2007 = vxor.u32 %v2006, 2147483648
    %v2008 = vsel %vm1925, %v2007, %v2006
    %v2009 = vsub.s32 4, %v1985
    %v2010 = vsel %vm1925, %v2009, %v1985
    %v2011 = vsel %vm1924, %v1922, %v2008
    %v2012 = vsel %vm1924, 0, %v2010
    %v2013 = vcosq.f32.pop %v2011
    %v2014 = vsinq.f32.pop %v2011
    %vm2015 = vweird.f32 %v1922
    %v2016 = vadd.s32 %v2012, 3
    %v2017 = vand.u32 %v2016, 3
    %vm2018 = vcmp.lt.s32.totalorder %v2017, 2
    %vm2019 = vcmp.eq.s32.totalorder %v2017, 0
    %v2020 = vxor.u32 %v2014, 2147483648
    %v2021 = vsel %vm2019, %v2013, %v2020
    %vm2022 = vcmp.eq.s32.totalorder %v2017, 2
    %v2023 = vxor.u32 %v2013, 2147483648
    %v2024 = vsel %vm2022, %v2023, %v2014
    %v2025 = vsel %vm2018, %v2021, %v2024
    %v2026 = vsel %vm2015, nan, %v2025
    %2027 = vst [vmem:[#allocation5 + $0x39] sm:$0x7] %v2026
    %v2028 = vand.u32 2147483647, %v1922
    %vm2029 = vcmp.le.f32.partialorder %v2028, 0.7853982
    %vm2030 = vcmp.lt.s32.totalorder %v1922, 0
    %v2031 = vand.u32 %v1922, 2139095040
    %v2032 = vshrl.u32 %v2031, 23
    %v2033 = vsub.s32 %v2032, 127
    %v2034 = vand.u32 2147483647, %v1922
    %v2035 = vand.u32 %v2034, 8388607
    %v2036 = vor.u32 %v2035, 8388608
    %v2037 = vsub.s32 0, %v2036
    %v2038 = vadd.s32 %v2033, 1
    %vm2039 = vcmp.gt.s32.totalorder %v2038, 0
    %v2040 = vsel %vm2039, %v2038, 0
    %v2041 = vshrl.u32 %v2040, 5
    %v2042 = vand.u32 %v2040, 31
    %v2043 = vsub.s32 32, %v2042
    %v2044 = vshrl.u32 683565275, %v2043
    %v2045 = vshll.u32 683565275, %v2042
    %v2046 = vshrl.u32 2475754826, %v2043
    %v2047 = vor.u32 %v2045, %v2046
    %v2048 = vshll.u32 2475754826, %v2042
    %v2049 = vshrl.u32 2131351028, %v2043
    %v2050 = vor.u32 %v2048, %v2049
    %v2051 = vshll.u32 2131351028, %v2042
    %v2052 = vshrl.u32 2102212464, %v2043
    %v2053 = vor.u32 %v2051, %v2052
    %v2054 = vshll.u32 2102212464, %v2042
    %v2055 = vshrl.u32 920167782, %v2043
    %v2056 = vor.u32 %v2054, %v2055
    %v2057 = vshll.u32 920167782, %v2042
    %v2058 = vshrl.u32 1326507024, %v2043
    %v2059 = vor.u32 %v2057, %v2058
    %vm2060 = vcmp.lt.s32.totalorder %v2041, 1
    %vm2061 = vcmp.lt.s32.totalorder %v2041, 2
    %vm2062 = vcmp.lt.s32.totalorder %v2041, 3
    %vm2063 = vcmp.lt.s32.totalorder %v2041, 4
    %v2064 = vsel %vm2060, %v2044, %v2047
    %v2065 = vsel %vm2063, %v2053, 2102212464
    %v2066 = vsel %vm2062, %v2050, %v2065
    %v2067 = vsel %vm2061, %v2064, %v2066
    %v2068 = vsel %vm2060, %v2047, %v2050
    %v2069 = vsel %vm2063, %v2056, 920167782
    %v2070 = vsel %vm2062, %v2053, %v2069
    %v2071 = vsel %vm2061, %v2068, %v2070
    %v2072 = vsel %vm2060, %v2050, %v2053
    %v2073 = vsel %vm2063, %v2059, 1326507024
    %v2074 = vsel %vm2062, %v2056, %v2073
    %v2075 = vsel %vm2061, %v2072, %v2074
    %v2076 = vshll.u32 %v2036, 8
    %v2077 = vmul.u32.u64.compose %v2076, %v2075
    %v2078 = vextract.low.u32 %v2077
    %v2079 = vextract.high.u32 %v2077
    %v2080 = vmul.u32.u64.compose %v2076, %v2071
    %v2081 = vextract.low.u32 %v2080
    %v2082 = vextract.high.u32 %v2080
    %v2083 = vmul.u32 %v2076, %v2067
    %v2084 = vadd.s32 %v2079, %v2081
    %vm2085 = vc.u32 %v2079, %v2081
    %v2086 = vadd.s32 %v2082, 1
    %v2087 = vsel %vm2085, %v2086, %v2082
    %v2088 = vadd.s32 %v2083, %v2087
    %v2089 = vadd.s32 %v2088, 536870912
    %v2090 = vshrl.u32 %v2089, 30
    %v2091 = vshll.u32 %v2090, 30
    %v2092 = vsub.s32 %v2088, %v2091
    %vm2093 = vcmp.lt.s32.totalorder %v2092, 0
    %v2094 = vsub.s32 0, %v2092
    %v2095 = vsel %vm2093, %v2094, %v2092
    %v2096 = vclz %v2095
    %v2097 = vsub.s32 %v2096, 2
    %vm2098 = vcmp.gt.s32.totalorder 0, %v2097
    %v2099 = vsel %vm2098, 0, %v2097
    %v2100 = vsub.s32 32, %v2099
    %v2101 = vshll.u32 %v2092, %v2099
    %v2102 = vshrl.u32 %v2084, %v2100
    %v2103 = vor.u32 %v2101, %v2102
    %v2104 = vsub.s32 4294967266, %v2099
    %v2105 = vadd.s32 %v2104, 127
    %v2106 = vshll.u32 %v2105, 23
    %v2107 = vor.u32 4788187, %v2106
    %v2108 = vand.u32 2147483647, %v2107
    %v2110 = vcvt.s32.f32 %v2103
    %v2111 = vmul.f32 %v2110, %v2108
    %v2112 = vxor.u32 %v2111, 2147483648
    %v2113 = vsel %vm2030, %v2112, %v2111
    %v2114 = vsub.s32 4, %v2090
    %v2115 = vsel %vm2030, %v2114, %v2090
    %v2116 = vsel %vm2029, %v1922, %v2113
    %v2117 = vsel %vm2029, 0, %v2115
    %v2118 = vcosq.f32.pop %v2116
    %v2119 = vsinq.f32.pop %v2116
    %vm2120 = vweird.f32 %v1922
    %v2121 = vand.u32 %v2117, 3
    %vm2122 = vcmp.lt.s32.totalorder %v2121, 2
    %vm2123 = vcmp.eq.s32.totalorder %v2121, 0
    %v2124 = vxor.u32 %v2119, 2147483648
    %v2125 = vsel %vm2123, %v2118, %v2124
    %vm2126 = vcmp.eq.s32.totalorder %v2121, 2
    %v2127 = vxor.u32 %v2118, 2147483648
    %v2128 = vsel %vm2126, %v2127, %v2119
    %v2129 = vsel %vm2122, %v2125, %v2128
    %v2130 = vsel %vm2120, nan, %v2129
    %2131 = vst [vmem:[#allocation5 + $0x3c] sm:$0x7] %v2130
    // Predicated region
    $region10: #{tpu_custom_call.1} parent=1 // pred_check
      _
    $region11: #{tpu_custom_call.1} parent=1 // pred_check_branch
      %2133 = sbr.rel (0) target = $region13
    $region12: #{tpu_custom_call.1} parent=1 // pred_region
      %s2135 = ssub.s32 1024, 1024
      %2136 = vsyncadd [#allocation4], %s2135
      %s2137 = sshll.u32 [#allocation5], 4
      %s2138 = int_to_ptr.vmem [resolvable:$true] %s2137
      %2143 = dma.vmem_to_hbm [thread:$0]  %s2138, 1024, %s1, [#allocation4], 128, 128, 8
    $region13: #{tpu_custom_call.1} parent=1 // pred_fallthru
      _
    // Predicated region
    $region14: #{tpu_custom_call.1} parent=1 // pred_check
      _
    $region15: #{tpu_custom_call.1} parent=1 // pred_check_branch
      %2145 = sbr.rel (0) target = $region17
    $region16: #{tpu_custom_call.1} parent=1 // pred_region
      %2146 = dma.done [#allocation4], 1024
    $region17: #{tpu_custom_call.1} parent=1 // pred_fallthru
      _
    %2147 = vsyncpa [#allocation3], 1
    %2148 = vsyncpa [#allocation4], 1

</llo_original>
